<compile_context>
chip_gen: v7x
topology: tpu7x:2x2x1
jax: 0.10.0
libtpu: 0.0.40
codegen_flags: <defaults>
</compile_context>

<pallas_src>
import jax
import jax.numpy as jnp
from jax.experimental import pallas as pl
from jax.experimental.pallas import tpu as pltpu

NUM_TARGETS = 2
SELU_ALPHA = 1.6732632423543772848170429916717
SELU_SCALE = 1.0507009873554804934193349852946

# Fixed ConvTransposeNet geometry (fc1 expects 288 = 32*3*3 -> 16x16 input).
CIN, HW_IN = 2, 16
K1, P1, C1 = 4, 2, 16            # layer1 ConvTranspose2d(2 -> 16, k=4, p=2)
K2, P2, C2 = 5, 2, 32            # layer2 ConvTranspose2d(16 -> 32, k=5, p=2)
PAD1 = K1 - 1 - P1               # 1: equivalent-conv padding for layer1
PAD2 = K2 - 1 - P2               # 2: equivalent-conv padding for layer2
H1 = HW_IN + 2 * PAD1 - K1 + 1   # 15: conv1 output H (= W)
HP1 = H1 // 2                    # 7 : pool1 output
H2 = HP1 + 2 * PAD2 - K2 + 1     # 7 : conv2 output
HP2 = H2 // 2                    # 3 : pool2 output


def _selu(x):
    # exp only sees non-positive values -> no spurious overflow on the positive branch.
    return SELU_SCALE * jnp.where(
        x > 0, x, SELU_ALPHA * (jnp.exp(jnp.minimum(x, 0.0)) - 1.0))


def _flip_hwio(w_pt):
    """PyTorch ConvTranspose2d weight (Cin, Cout, KH, KW) -> correlation kernel
    (KH, KW, Cin, Cout) with spatial flip (stride-1 transposed conv ==
    regular conv with flipped kernel)."""
    return jnp.flip(w_pt, axis=(2, 3)).transpose(2, 3, 0, 1)


def _band_weights(wf, w_in, w_out, w_off):
    """Banded (block-Toeplitz) matrices turning a row convolution into a plain
    matmul.  Returns B of shape (KH, w_in*Cin, w_out*Cout) such that, for input
    rows laid out as [wi*Cin + ci] (wi living at padded position wi + w_off),
        out_row_h[w*Cout + co] = sum_kh  in_row_(h+kh) @ B[kh].
    The W padding of the conv is folded into B via w_off."""
    KH, KW, Cin, Cout = wf.shape
    kw = (jnp.arange(w_in)[None, :] + w_off) - jnp.arange(w_out)[:, None]  # (w_out, w_in)
    valid = (kw >= 0) & (kw < KW)
    kwc = jnp.clip(kw, 0, KW - 1)
    t = wf[:, kwc, :, :]                                   # (KH, w_out, w_in, Cin, Cout)
    t = t * valid[None, :, :, None, None].astype(wf.dtype)
    t = t.transpose(0, 2, 3, 1, 4)                         # (KH, w_in, Cin, w_out, Cout)
    return t.reshape(KH, w_in * Cin, w_out * Cout)


# ------------------------------ fused kernel ------------------------------

def _fused_forward_kernel(x_ref, b1m_ref, b1v_ref, b2m_ref, b2v_ref,
                          wfc_ref, bfc_ref, logits_ref, hm1_ref, x2_ref):
    # ----- layer1: ConvTranspose2d(2->16, k=4, s=1, p=2) + SELU -----
    xv = x_ref[0]                                           # (18, 32): [h, w*2+ci]
    acc1 = jnp.dot(xv[0:H1, :], b1m_ref[0], preferred_element_type=jnp.float32)
    for kh in range(1, K1):
        acc1 += jnp.dot(xv[kh:kh + H1, :], b1m_ref[kh],
                        preferred_element_type=jnp.float32)
    h1 = _selu(acc1 + b1v_ref[...])                         # (15, 240): [h, w*16+c]

    # ----- pool1: 2x2 / stride 2, floor mode -----
    # max over row pairs ...
    for hp in range(HP1):
        hm1_ref[hp:hp + 1, :] = jnp.maximum(h1[2 * hp:2 * hp + 1, :],
                                            h1[2 * hp + 1:2 * hp + 2, :])
    hm1 = hm1_ref[...]                                      # (7, 240)
    # ... then max over column-block pairs, written straight into the H-padded
    # conv2 input scratch (conv2's W padding is folded into its band matrices).
    x2_ref[...] = jnp.zeros_like(x2_ref)                    # zero the H-pad rows
    for wp in range(HP1):
        lo = 2 * wp * C1
        x2_ref[PAD2:PAD2 + HP1, wp * C1:(wp + 1) * C1] = jnp.maximum(
            hm1[:, lo:lo + C1], hm1[:, lo + C1:lo + 2 * C1])

    # ----- layer2: ConvTranspose2d(16->32, k=5, s=1, p=2) + SELU -----
    x2v = x2_ref[...]                                       # (11, 112): [h, w*16+c]
    acc2 = jnp.dot(x2v[0:H2, :], b2m_ref[0], preferred_element_type=jnp.float32)
    for kh in range(1, K2):
        acc2 += jnp.dot(x2v[kh:kh + H2, :], b2m_ref[kh],
                        preferred_element_type=jnp.float32)
    h2 = _selu(acc2 + b2v_ref[...])                         # (7, 224): [h, w*32+c]

    # ----- pool2 (2x2 / 2, floor) fused with fc1 -----
    acc = bfc_ref[...]                                      # (1, 2)
    for hp in range(HP2):
        hm2 = jnp.maximum(h2[2 * hp:2 * hp + 1, :], h2[2 * hp + 1:2 * hp + 2, :])
        for wp in range(HP2):
            lo = 2 * wp * C2
            blk = jnp.maximum(hm2[:, lo:lo + C2], hm2[:, lo + C2:lo + 2 * C2])
            acc = acc + jnp.dot(blk, wfc_ref[hp, wp],
                                preferred_element_type=jnp.float32)
    logits_ref[0] = acc


# ------------------------------ JAX wrapper ------------------------------

def convtransposenet_forward(x_nchw, params):
    """Forward pass of ConvTransposeNet.  Returns (predicted, logits)."""
    x = jnp.transpose(x_nchw, (0, 2, 3, 1)).astype(jnp.float32)        # NCHW -> NHWC
    n = x.shape[0]
    # Pad H only; W padding is folded into the banded weight matrices.
    xh = jnp.pad(x, ((0, 0), (PAD1, PAD1), (0, 0), (0, 0)))            # (N, 18, 16, 2)
    xh = xh.reshape(n, HW_IN + 2 * PAD1, HW_IN * CIN)                  # (N, 18, 32)

    # --- weight prep (tiny, plain JAX, once per call) ---
    wf1 = _flip_hwio(params["w1"].astype(jnp.float32))                 # (4, 4, 2, 16)
    wf2 = _flip_hwio(params["w2"].astype(jnp.float32))                 # (5, 5, 16, 32)
    b1m = _band_weights(wf1, HW_IN, H1, PAD1)                          # (4, 32, 240)
    b2m = _band_weights(wf2, HP1, H2, PAD2)                            # (5, 112, 224)
    b1v = jnp.tile(params["b1"].astype(jnp.float32), H1)[None, :]      # (1, 240)
    b2v = jnp.tile(params["b2"].astype(jnp.float32), H2)[None, :]      # (1, 224)
    # PyTorch flattens (C, H, W); reorder the fc weight to the kernel's (h, w, c) blocks.
    wfc = params["fc_w"].astype(jnp.float32).reshape(NUM_TARGETS, C2, HP2, HP2)
    wfc = wfc.transpose(2, 3, 1, 0)                                    # (3, 3, 32, 2)
    bfc = params["fc_b"].astype(jnp.float32)[None, :]                  # (1, 2)

    out3 = pl.pallas_call(
        _fused_forward_kernel,
        out_shape=jax.ShapeDtypeStruct((n, 1, NUM_TARGETS), jnp.float32),
        grid=(n,),
        in_specs=[
            pl.BlockSpec((1, HW_IN + 2 * PAD1, HW_IN * CIN), lambda b: (b, 0, 0)),
            pl.BlockSpec(b1m.shape, lambda b: (0, 0, 0)),
            pl.BlockSpec(b1v.shape, lambda b: (0, 0)),
            pl.BlockSpec(b2m.shape, lambda b: (0, 0, 0)),
            pl.BlockSpec(b2v.shape, lambda b: (0, 0)),
            pl.BlockSpec(wfc.shape, lambda b: (0, 0, 0, 0)),
            pl.BlockSpec(bfc.shape, lambda b: (0, 0)),
        ],
        out_specs=pl.BlockSpec((1, 1, NUM_TARGETS), lambda b: (b, 0, 0)),
        scratch_shapes=[
            pltpu.VMEM((HP1, H1 * C1), jnp.float32),                   # (7, 240) H-pooled conv1
            pltpu.VMEM((HP1 + 2 * PAD2, HP1 * C1), jnp.float32),       # (11, 112) padded conv2 in
        ],
        compiler_params=pltpu.CompilerParams(
            dimension_semantics=("parallel",)),
    )(xh, b1m, b1v, b2m, b2v, wfc, bfc)

    logits = out3[:, 0, :]
    # nn.Dropout() is identity in eval mode.
    # TODO(synk): training-mode dropout RNG not implemented.
    predicted = jnp.argmax(logits, axis=1)   # first-max tie break, like torch.argmax
    return predicted, logits


# ------------------------------ demo ------------------------------

if __name__ == "__main__":
    key = jax.random.PRNGKey(0)
    k_x, k_w1, k_b1, k_w2, k_b2, k_fw, k_fb = jax.random.split(key, 7)

    # input 16x16 -> conv 15 -> pool 7 -> conv 7 -> pool 3 ; 32*3*3 = 288 features
    x = jax.random.normal(k_x, (2, CIN, HW_IN, HW_IN), dtype=jnp.float32)

    params = {
        "w1": jax.random.normal(k_w1, (CIN, C1, K1, K1), jnp.float32) * 0.10,
        "b1": jax.random.normal(k_b1, (C1,), jnp.float32) * 0.10,
        "w2": jax.random.normal(k_w2, (C1, C2, K2, K2), jnp.float32) * 0.05,
        "b2": jax.random.normal(k_b2, (C2,), jnp.float32) * 0.05,
        "fc_w": jax.random.normal(k_fw, (NUM_TARGETS, C2 * HP2 * HP2), jnp.float32) * 0.05,
        "fc_b": jax.random.normal(k_fb, (NUM_TARGETS,), jnp.float32) * 0.05,
    }

    predicted, logits = jax.jit(convtransposenet_forward)(x, params)
    jax.block_until_ready((predicted, logits))

    assert logits.shape == (2, NUM_TARGETS), logits.shape
    assert predicted.shape == (2,), predicted.shape
    print("KERNEL_OK")
</pallas_src>

<mosaic_0001>
module attributes {stable_mosaic.version = 11 : i64} {
  func.func @_fused_forward_kernel(%arg0: i32, %arg1: memref<1x18x32xf32, #tpu.memory_space<vmem>>, %arg2: memref<4x32x240xf32, #tpu.memory_space<vmem>>, %arg3: memref<1x240xf32, #tpu.memory_space<vmem>>, %arg4: memref<5x112x224xf32, #tpu.memory_space<vmem>>, %arg5: memref<1x224xf32, #tpu.memory_space<vmem>>, %arg6: memref<3x3x32x2xf32, #tpu.memory_space<vmem>>, %arg7: memref<1x2xf32, #tpu.memory_space<vmem>>, %arg8: memref<1x1x2xf32, #tpu.memory_space<vmem>>, %arg9: memref<7x240xf32, #tpu.memory_space<vmem>>, %arg10: memref<11x112xf32, #tpu.memory_space<vmem>>) attributes {dimension_semantics = [#tpu.dimension_semantics<parallel>], iteration_bounds = array<i64: 2>, scalar_prefetch = 0 : i64, scratch_operands = 2 : i64, tpu.core_type = #tpu.core_type<tc>, window_params = [{transform_indices = @transform_0, window_bounds = array<i64: 1, 18, 32>}, {pipeline_mode = #tpu.pipeline_mode<synchronous>, transform_indices = @transform_1, window_bounds = array<i64: 4, 32, 240>}, {pipeline_mode = #tpu.pipeline_mode<synchronous>, transform_indices = @transform_2, window_bounds = array<i64: 1, 240>}, {pipeline_mode = #tpu.pipeline_mode<synchronous>, transform_indices = @transform_3, window_bounds = array<i64: 5, 112, 224>}, {pipeline_mode = #tpu.pipeline_mode<synchronous>, transform_indices = @transform_4, window_bounds = array<i64: 1, 224>}, {pipeline_mode = #tpu.pipeline_mode<synchronous>, transform_indices = @transform_5, window_bounds = array<i64: 3, 3, 32, 2>}, {pipeline_mode = #tpu.pipeline_mode<synchronous>, transform_indices = @transform_6, window_bounds = array<i64: 1, 2>}, {transform_indices = @transform_7, window_bounds = array<i64: 1, 1, 2>}]} {
    %c0 = arith.constant 0 : index
    %c0_0 = arith.constant 0 : index
    %c0_1 = arith.constant 0 : index
    %0 = vector.load %arg1[%c0, %c0_0, %c0_1] : memref<1x18x32xf32, #tpu.memory_space<vmem>>, vector<1x18x32xf32>
    %1 = vector.shape_cast %0 : vector<1x18x32xf32> to vector<18x32xf32>
    %2 = vector.extract_strided_slice %1 {offsets = [0, 0], sizes = [15, 32], strides = [1, 1]} : vector<18x32xf32> to vector<15x32xf32>
    %c0_2 = arith.constant 0 : index
    %c0_3 = arith.constant 0 : index
    %c0_4 = arith.constant 0 : index
    %3 = vector.load %arg2[%c0_2, %c0_3, %c0_4] : memref<4x32x240xf32, #tpu.memory_space<vmem>>, vector<1x32x240xf32>
    %4 = vector.shape_cast %3 : vector<1x32x240xf32> to vector<32x240xf32>
    %cst = arith.constant dense<0.000000e+00> : vector<15x240xf32>
    %5 = tpu.matmul %2, %4, %cst {dimension_numbers = #tpu.dot_dimension_numbers<[1], [0], [0], [1], [0, 0, 1, 1], [], []>} : vector<15x32xf32>, vector<32x240xf32>, vector<15x240xf32> -> vector<15x240xf32>
    %6 = vector.extract_strided_slice %1 {offsets = [1, 0], sizes = [15, 32], strides = [1, 1]} : vector<18x32xf32> to vector<15x32xf32>
    %c1 = arith.constant 1 : index
    %c0_5 = arith.constant 0 : index
    %c0_6 = arith.constant 0 : index
    %7 = vector.load %arg2[%c1, %c0_5, %c0_6] : memref<4x32x240xf32, #tpu.memory_space<vmem>>, vector<1x32x240xf32>
    %8 = vector.shape_cast %7 : vector<1x32x240xf32> to vector<32x240xf32>
    %cst_7 = arith.constant dense<0.000000e+00> : vector<15x240xf32>
    %9 = tpu.matmul %6, %8, %cst_7 {dimension_numbers = #tpu.dot_dimension_numbers<[1], [0], [0], [1], [0, 0, 1, 1], [], []>} : vector<15x32xf32>, vector<32x240xf32>, vector<15x240xf32> -> vector<15x240xf32>
    %10 = arith.addf %5, %9 : vector<15x240xf32>
    %11 = vector.extract_strided_slice %1 {offsets = [2, 0], sizes = [15, 32], strides = [1, 1]} : vector<18x32xf32> to vector<15x32xf32>
    %c2 = arith.constant 2 : index
    %c0_8 = arith.constant 0 : index
    %c0_9 = arith.constant 0 : index
    %12 = vector.load %arg2[%c2, %c0_8, %c0_9] : memref<4x32x240xf32, #tpu.memory_space<vmem>>, vector<1x32x240xf32>
    %13 = vector.shape_cast %12 : vector<1x32x240xf32> to vector<32x240xf32>
    %cst_10 = arith.constant dense<0.000000e+00> : vector<15x240xf32>
    %14 = tpu.matmul %11, %13, %cst_10 {dimension_numbers = #tpu.dot_dimension_numbers<[1], [0], [0], [1], [0, 0, 1, 1], [], []>} : vector<15x32xf32>, vector<32x240xf32>, vector<15x240xf32> -> vector<15x240xf32>
    %15 = arith.addf %10, %14 : vector<15x240xf32>
    %16 = vector.extract_strided_slice %1 {offsets = [3, 0], sizes = [15, 32], strides = [1, 1]} : vector<18x32xf32> to vector<15x32xf32>
    %c3 = arith.constant 3 : index
    %c0_11 = arith.constant 0 : index
    %c0_12 = arith.constant 0 : index
    %17 = vector.load %arg2[%c3, %c0_11, %c0_12] : memref<4x32x240xf32, #tpu.memory_space<vmem>>, vector<1x32x240xf32>
    %18 = vector.shape_cast %17 : vector<1x32x240xf32> to vector<32x240xf32>
    %cst_13 = arith.constant dense<0.000000e+00> : vector<15x240xf32>
    %19 = tpu.matmul %16, %18, %cst_13 {dimension_numbers = #tpu.dot_dimension_numbers<[1], [0], [0], [1], [0, 0, 1, 1], [], []>} : vector<15x32xf32>, vector<32x240xf32>, vector<15x240xf32> -> vector<15x240xf32>
    %20 = arith.addf %15, %19 : vector<15x240xf32>
    %c0_14 = arith.constant 0 : index
    %c0_15 = arith.constant 0 : index
    %21 = vector.load %arg3[%c0_14, %c0_15] : memref<1x240xf32, #tpu.memory_space<vmem>>, vector<1x240xf32>
    %22 = vector.broadcast %21 : vector<1x240xf32> to vector<15x240xf32>
    %23 = arith.addf %20, %22 : vector<15x240xf32>
    %cst_16 = arith.constant 0.000000e+00 : f32
    %24 = vector.broadcast %cst_16 : f32 to vector<15x240xf32>
    %25 = arith.cmpf ogt, %23, %24 : vector<15x240xf32>
    %cst_17 = arith.constant 0.000000e+00 : f32
    %26 = vector.broadcast %cst_17 : f32 to vector<15x240xf32>
    %27 = arith.minimumf %23, %26 : vector<15x240xf32>
    %28 = math.exp %27 : vector<15x240xf32>
    %cst_18 = arith.constant 1.000000e+00 : f32
    %29 = vector.broadcast %cst_18 : f32 to vector<15x240xf32>
    %30 = arith.subf %28, %29 : vector<15x240xf32>
    %cst_19 = arith.constant 1.67326319 : f32
    %31 = vector.broadcast %cst_19 : f32 to vector<15x240xf32>
    %32 = arith.mulf %31, %30 : vector<15x240xf32>
    %33 = arith.select %25, %23, %32 : vector<15x240xi1>, vector<15x240xf32>
    %cst_20 = arith.constant 1.05070102 : f32
    %34 = vector.broadcast %cst_20 : f32 to vector<15x240xf32>
    %35 = arith.mulf %34, %33 : vector<15x240xf32>
    %36 = vector.extract_strided_slice %35 {offsets = [0, 0], sizes = [1, 240], strides = [1, 1]} : vector<15x240xf32> to vector<1x240xf32>
    %37 = vector.extract_strided_slice %35 {offsets = [1, 0], sizes = [1, 240], strides = [1, 1]} : vector<15x240xf32> to vector<1x240xf32>
    %38 = arith.maximumf %36, %37 : vector<1x240xf32>
    %c0_21 = arith.constant 0 : index
    %c0_22 = arith.constant 0 : index
    %39 = vector.load %arg9[%c0_21, %c0_22] : memref<7x240xf32, #tpu.memory_space<vmem>>, vector<1x240xf32>
    tpu.vector_store %arg9[%c0_21, %c0_22], %38 {strides = array<i32>} : memref<7x240xf32, #tpu.memory_space<vmem>>, vector<1x240xf32>,
    %40 = vector.extract_strided_slice %35 {offsets = [2, 0], sizes = [1, 240], strides = [1, 1]} : vector<15x240xf32> to vector<1x240xf32>
    %41 = vector.extract_strided_slice %35 {offsets = [3, 0], sizes = [1, 240], strides = [1, 1]} : vector<15x240xf32> to vector<1x240xf32>
    %42 = arith.maximumf %40, %41 : vector<1x240xf32>
    %c1_23 = arith.constant 1 : index
    %c0_24 = arith.constant 0 : index
    %43 = vector.load %arg9[%c1_23, %c0_24] : memref<7x240xf32, #tpu.memory_space<vmem>>, vector<1x240xf32>
    tpu.vector_store %arg9[%c1_23, %c0_24], %42 {strides = array<i32>} : memref<7x240xf32, #tpu.memory_space<vmem>>, vector<1x240xf32>,
    %44 = vector.extract_strided_slice %35 {offsets = [4, 0], sizes = [1, 240], strides = [1, 1]} : vector<15x240xf32> to vector<1x240xf32>
    %45 = vector.extract_strided_slice %35 {offsets = [5, 0], sizes = [1, 240], strides = [1, 1]} : vector<15x240xf32> to vector<1x240xf32>
    %46 = arith.maximumf %44, %45 : vector<1x240xf32>
    %c2_25 = arith.constant 2 : index
    %c0_26 = arith.constant 0 : index
    %47 = vector.load %arg9[%c2_25, %c0_26] : memref<7x240xf32, #tpu.memory_space<vmem>>, vector<1x240xf32>
    tpu.vector_store %arg9[%c2_25, %c0_26], %46 {strides = array<i32>} : memref<7x240xf32, #tpu.memory_space<vmem>>, vector<1x240xf32>,
    %48 = vector.extract_strided_slice %35 {offsets = [6, 0], sizes = [1, 240], strides = [1, 1]} : vector<15x240xf32> to vector<1x240xf32>
    %49 = vector.extract_strided_slice %35 {offsets = [7, 0], sizes = [1, 240], strides = [1, 1]} : vector<15x240xf32> to vector<1x240xf32>
    %50 = arith.maximumf %48, %49 : vector<1x240xf32>
    %c3_27 = arith.constant 3 : index
    %c0_28 = arith.constant 0 : index
    %51 = vector.load %arg9[%c3_27, %c0_28] : memref<7x240xf32, #tpu.memory_space<vmem>>, vector<1x240xf32>
    tpu.vector_store %arg9[%c3_27, %c0_28], %50 {strides = array<i32>} : memref<7x240xf32, #tpu.memory_space<vmem>>, vector<1x240xf32>,
    %52 = vector.extract_strided_slice %35 {offsets = [8, 0], sizes = [1, 240], strides = [1, 1]} : vector<15x240xf32> to vector<1x240xf32>
    %53 = vector.extract_strided_slice %35 {offsets = [9, 0], sizes = [1, 240], strides = [1, 1]} : vector<15x240xf32> to vector<1x240xf32>
    %54 = arith.maximumf %52, %53 : vector<1x240xf32>
    %c4 = arith.constant 4 : index
    %c0_29 = arith.constant 0 : index
    %55 = vector.load %arg9[%c4, %c0_29] : memref<7x240xf32, #tpu.memory_space<vmem>>, vector<1x240xf32>
    tpu.vector_store %arg9[%c4, %c0_29], %54 {strides = array<i32>} : memref<7x240xf32, #tpu.memory_space<vmem>>, vector<1x240xf32>,
    %56 = vector.extract_strided_slice %35 {offsets = [10, 0], sizes = [1, 240], strides = [1, 1]} : vector<15x240xf32> to vector<1x240xf32>
    %57 = vector.extract_strided_slice %35 {offsets = [11, 0], sizes = [1, 240], strides = [1, 1]} : vector<15x240xf32> to vector<1x240xf32>
    %58 = arith.maximumf %56, %57 : vector<1x240xf32>
    %c5 = arith.constant 5 : index
    %c0_30 = arith.constant 0 : index
    %59 = vector.load %arg9[%c5, %c0_30] : memref<7x240xf32, #tpu.memory_space<vmem>>, vector<1x240xf32>
    tpu.vector_store %arg9[%c5, %c0_30], %58 {strides = array<i32>} : memref<7x240xf32, #tpu.memory_space<vmem>>, vector<1x240xf32>,
    %60 = vector.extract_strided_slice %35 {offsets = [12, 0], sizes = [1, 240], strides = [1, 1]} : vector<15x240xf32> to vector<1x240xf32>
    %61 = vector.extract_strided_slice %35 {offsets = [13, 0], sizes = [1, 240], strides = [1, 1]} : vector<15x240xf32> to vector<1x240xf32>
    %62 = arith.maximumf %60, %61 : vector<1x240xf32>
    %c6 = arith.constant 6 : index
    %c0_31 = arith.constant 0 : index
    %63 = vector.load %arg9[%c6, %c0_31] : memref<7x240xf32, #tpu.memory_space<vmem>>, vector<1x240xf32>
    tpu.vector_store %arg9[%c6, %c0_31], %62 {strides = array<i32>} : memref<7x240xf32, #tpu.memory_space<vmem>>, vector<1x240xf32>,
    %c0_32 = arith.constant 0 : index
    %c0_33 = arith.constant 0 : index
    %64 = vector.load %arg9[%c0_32, %c0_33] : memref<7x240xf32, #tpu.memory_space<vmem>>, vector<7x240xf32>
    %cst_34 = arith.constant 0.000000e+00 : f32
    %65 = vector.broadcast %cst_34 : f32 to vector<11x112xf32>
    %c0_35 = arith.constant 0 : index
    %c0_36 = arith.constant 0 : index
    %66 = vector.load %arg10[%c0_35, %c0_36] : memref<11x112xf32, #tpu.memory_space<vmem>>, vector<11x112xf32>
    tpu.vector_store %arg10[%c0_35, %c0_36], %65 {strides = array<i32>} : memref<11x112xf32, #tpu.memory_space<vmem>>, vector<11x112xf32>,
    %67 = vector.extract_strided_slice %64 {offsets = [0, 0], sizes = [7, 16], strides = [1, 1]} : vector<7x240xf32> to vector<7x16xf32>
    %68 = vector.extract_strided_slice %64 {offsets = [0, 16], sizes = [7, 16], strides = [1, 1]} : vector<7x240xf32> to vector<7x16xf32>
    %69 = arith.maximumf %67, %68 : vector<7x16xf32>
    %c2_37 = arith.constant 2 : index
    %c0_38 = arith.constant 0 : index
    %70 = vector.load %arg10[%c2_37, %c0_38] : memref<11x112xf32, #tpu.memory_space<vmem>>, vector<7x16xf32>
    tpu.vector_store %arg10[%c2_37, %c0_38], %69 {strides = array<i32>} : memref<11x112xf32, #tpu.memory_space<vmem>>, vector<7x16xf32>,
    %71 = vector.extract_strided_slice %64 {offsets = [0, 32], sizes = [7, 16], strides = [1, 1]} : vector<7x240xf32> to vector<7x16xf32>
    %72 = vector.extract_strided_slice %64 {offsets = [0, 48], sizes = [7, 16], strides = [1, 1]} : vector<7x240xf32> to vector<7x16xf32>
    %73 = arith.maximumf %71, %72 : vector<7x16xf32>
    %c2_39 = arith.constant 2 : index
    %c16 = arith.constant 16 : index
    %74 = vector.load %arg10[%c2_39, %c16] : memref<11x112xf32, #tpu.memory_space<vmem>>, vector<7x16xf32>
    tpu.vector_store %arg10[%c2_39, %c16], %73 {strides = array<i32>} : memref<11x112xf32, #tpu.memory_space<vmem>>, vector<7x16xf32>,
    %75 = vector.extract_strided_slice %64 {offsets = [0, 64], sizes = [7, 16], strides = [1, 1]} : vector<7x240xf32> to vector<7x16xf32>
    %76 = vector.extract_strided_slice %64 {offsets = [0, 80], sizes = [7, 16], strides = [1, 1]} : vector<7x240xf32> to vector<7x16xf32>
    %77 = arith.maximumf %75, %76 : vector<7x16xf32>
    %c2_40 = arith.constant 2 : index
    %c32 = arith.constant 32 : index
    %78 = vector.load %arg10[%c2_40, %c32] : memref<11x112xf32, #tpu.memory_space<vmem>>, vector<7x16xf32>
    tpu.vector_store %arg10[%c2_40, %c32], %77 {strides = array<i32>} : memref<11x112xf32, #tpu.memory_space<vmem>>, vector<7x16xf32>,
    %79 = vector.extract_strided_slice %64 {offsets = [0, 96], sizes = [7, 16], strides = [1, 1]} : vector<7x240xf32> to vector<7x16xf32>
    %80 = vector.extract_strided_slice %64 {offsets = [0, 112], sizes = [7, 16], strides = [1, 1]} : vector<7x240xf32> to vector<7x16xf32>
    %81 = arith.maximumf %79, %80 : vector<7x16xf32>
    %c2_41 = arith.constant 2 : index
    %c48 = arith.constant 48 : index
    %82 = vector.load %arg10[%c2_41, %c48] : memref<11x112xf32, #tpu.memory_space<vmem>>, vector<7x16xf32>
    tpu.vector_store %arg10[%c2_41, %c48], %81 {strides = array<i32>} : memref<11x112xf32, #tpu.memory_space<vmem>>, vector<7x16xf32>,
    %83 = vector.extract_strided_slice %64 {offsets = [0, 128], sizes = [7, 16], strides = [1, 1]} : vector<7x240xf32> to vector<7x16xf32>
    %84 = vector.extract_strided_slice %64 {offsets = [0, 144], sizes = [7, 16], strides = [1, 1]} : vector<7x240xf32> to vector<7x16xf32>
    %85 = arith.maximumf %83, %84 : vector<7x16xf32>
    %c2_42 = arith.constant 2 : index
    %c64 = arith.constant 64 : index
    %86 = vector.load %arg10[%c2_42, %c64] : memref<11x112xf32, #tpu.memory_space<vmem>>, vector<7x16xf32>
    tpu.vector_store %arg10[%c2_42, %c64], %85 {strides = array<i32>} : memref<11x112xf32, #tpu.memory_space<vmem>>, vector<7x16xf32>,
    %87 = vector.extract_strided_slice %64 {offsets = [0, 160], sizes = [7, 16], strides = [1, 1]} : vector<7x240xf32> to vector<7x16xf32>
    %88 = vector.extract_strided_slice %64 {offsets = [0, 176], sizes = [7, 16], strides = [1, 1]} : vector<7x240xf32> to vector<7x16xf32>
    %89 = arith.maximumf %87, %88 : vector<7x16xf32>
    %c2_43 = arith.constant 2 : index
    %c80 = arith.constant 80 : index
    %90 = vector.load %arg10[%c2_43, %c80] : memref<11x112xf32, #tpu.memory_space<vmem>>, vector<7x16xf32>
    tpu.vector_store %arg10[%c2_43, %c80], %89 {strides = array<i32>} : memref<11x112xf32, #tpu.memory_space<vmem>>, vector<7x16xf32>,
    %91 = vector.extract_strided_slice %64 {offsets = [0, 192], sizes = [7, 16], strides = [1, 1]} : vector<7x240xf32> to vector<7x16xf32>
    %92 = vector.extract_strided_slice %64 {offsets = [0, 208], sizes = [7, 16], strides = [1, 1]} : vector<7x240xf32> to vector<7x16xf32>
    %93 = arith.maximumf %91, %92 : vector<7x16xf32>
    %c2_44 = arith.constant 2 : index
    %c96 = arith.constant 96 : index
    %94 = vector.load %arg10[%c2_44, %c96] : memref<11x112xf32, #tpu.memory_space<vmem>>, vector<7x16xf32>
    tpu.vector_store %arg10[%c2_44, %c96], %93 {strides = array<i32>} : memref<11x112xf32, #tpu.memory_space<vmem>>, vector<7x16xf32>,
    %c0_45 = arith.constant 0 : index
    %c0_46 = arith.constant 0 : index
    %95 = vector.load %arg10[%c0_45, %c0_46] : memref<11x112xf32, #tpu.memory_space<vmem>>, vector<11x112xf32>
    %96 = vector.extract_strided_slice %95 {offsets = [0, 0], sizes = [7, 112], strides = [1, 1]} : vector<11x112xf32> to vector<7x112xf32>
    %c0_47 = arith.constant 0 : index
    %c0_48 = arith.constant 0 : index
    %c0_49 = arith.constant 0 : index
    %97 = vector.load %arg4[%c0_47, %c0_48, %c0_49] : memref<5x112x224xf32, #tpu.memory_space<vmem>>, vector<1x112x224xf32>
    %98 = vector.shape_cast %97 : vector<1x112x224xf32> to vector<112x224xf32>
    %cst_50 = arith.constant dense<0.000000e+00> : vector<7x224xf32>
    %99 = tpu.matmul %96, %98, %cst_50 {dimension_numbers = #tpu.dot_dimension_numbers<[1], [0], [0], [1], [0, 0, 1, 1], [], []>} : vector<7x112xf32>, vector<112x224xf32>, vector<7x224xf32> -> vector<7x224xf32>
    %100 = vector.extract_strided_slice %95 {offsets = [1, 0], sizes = [7, 112], strides = [1, 1]} : vector<11x112xf32> to vector<7x112xf32>
    %c1_51 = arith.constant 1 : index
    %c0_52 = arith.constant 0 : index
    %c0_53 = arith.constant 0 : index
    %101 = vector.load %arg4[%c1_51, %c0_52, %c0_53] : memref<5x112x224xf32, #tpu.memory_space<vmem>>, vector<1x112x224xf32>
    %102 = vector.shape_cast %101 : vector<1x112x224xf32> to vector<112x224xf32>
    %cst_54 = arith.constant dense<0.000000e+00> : vector<7x224xf32>
    %103 = tpu.matmul %100, %102, %cst_54 {dimension_numbers = #tpu.dot_dimension_numbers<[1], [0], [0], [1], [0, 0, 1, 1], [], []>} : vector<7x112xf32>, vector<112x224xf32>, vector<7x224xf32> -> vector<7x224xf32>
    %104 = arith.addf %99, %103 : vector<7x224xf32>
    %105 = vector.extract_strided_slice %95 {offsets = [2, 0], sizes = [7, 112], strides = [1, 1]} : vector<11x112xf32> to vector<7x112xf32>
    %c2_55 = arith.constant 2 : index
    %c0_56 = arith.constant 0 : index
    %c0_57 = arith.constant 0 : index
    %106 = vector.load %arg4[%c2_55, %c0_56, %c0_57] : memref<5x112x224xf32, #tpu.memory_space<vmem>>, vector<1x112x224xf32>
    %107 = vector.shape_cast %106 : vector<1x112x224xf32> to vector<112x224xf32>
    %cst_58 = arith.constant dense<0.000000e+00> : vector<7x224xf32>
    %108 = tpu.matmul %105, %107, %cst_58 {dimension_numbers = #tpu.dot_dimension_numbers<[1], [0], [0], [1], [0, 0, 1, 1], [], []>} : vector<7x112xf32>, vector<112x224xf32>, vector<7x224xf32> -> vector<7x224xf32>
    %109 = arith.addf %104, %108 : vector<7x224xf32>
    %110 = vector.extract_strided_slice %95 {offsets = [3, 0], sizes = [7, 112], strides = [1, 1]} : vector<11x112xf32> to vector<7x112xf32>
    %c3_59 = arith.constant 3 : index
    %c0_60 = arith.constant 0 : index
    %c0_61 = arith.constant 0 : index
    %111 = vector.load %arg4[%c3_59, %c0_60, %c0_61] : memref<5x112x224xf32, #tpu.memory_space<vmem>>, vector<1x112x224xf32>
    %112 = vector.shape_cast %111 : vector<1x112x224xf32> to vector<112x224xf32>
    %cst_62 = arith.constant dense<0.000000e+00> : vector<7x224xf32>
    %113 = tpu.matmul %110, %112, %cst_62 {dimension_numbers = #tpu.dot_dimension_numbers<[1], [0], [0], [1], [0, 0, 1, 1], [], []>} : vector<7x112xf32>, vector<112x224xf32>, vector<7x224xf32> -> vector<7x224xf32>
    %114 = arith.addf %109, %113 : vector<7x224xf32>
    %115 = vector.extract_strided_slice %95 {offsets = [4, 0], sizes = [7, 112], strides = [1, 1]} : vector<11x112xf32> to vector<7x112xf32>
    %c4_63 = arith.constant 4 : index
    %c0_64 = arith.constant 0 : index
    %c0_65 = arith.constant 0 : index
    %116 = vector.load %arg4[%c4_63, %c0_64, %c0_65] : memref<5x112x224xf32, #tpu.memory_space<vmem>>, vector<1x112x224xf32>
    %117 = vector.shape_cast %116 : vector<1x112x224xf32> to vector<112x224xf32>
    %cst_66 = arith.constant dense<0.000000e+00> : vector<7x224xf32>
    %118 = tpu.matmul %115, %117, %cst_66 {dimension_numbers = #tpu.dot_dimension_numbers<[1], [0], [0], [1], [0, 0, 1, 1], [], []>} : vector<7x112xf32>, vector<112x224xf32>, vector<7x224xf32> -> vector<7x224xf32>
    %119 = arith.addf %114, %118 : vector<7x224xf32>
    %c0_67 = arith.constant 0 : index
    %c0_68 = arith.constant 0 : index
    %120 = vector.load %arg5[%c0_67, %c0_68] : memref<1x224xf32, #tpu.memory_space<vmem>>, vector<1x224xf32>
    %121 = vector.broadcast %120 : vector<1x224xf32> to vector<7x224xf32>
    %122 = arith.addf %119, %121 : vector<7x224xf32>
    %cst_69 = arith.constant 0.000000e+00 : f32
    %123 = vector.broadcast %cst_69 : f32 to vector<7x224xf32>
    %124 = arith.cmpf ogt, %122, %123 : vector<7x224xf32>
    %cst_70 = arith.constant 0.000000e+00 : f32
    %125 = vector.broadcast %cst_70 : f32 to vector<7x224xf32>
    %126 = arith.minimumf %122, %125 : vector<7x224xf32>
    %127 = math.exp %126 : vector<7x224xf32>
    %cst_71 = arith.constant 1.000000e+00 : f32
    %128 = vector.broadcast %cst_71 : f32 to vector<7x224xf32>
    %129 = arith.subf %127, %128 : vector<7x224xf32>
    %cst_72 = arith.constant 1.67326319 : f32
    %130 = vector.broadcast %cst_72 : f32 to vector<7x224xf32>
    %131 = arith.mulf %130, %129 : vector<7x224xf32>
    %132 = arith.select %124, %122, %131 : vector<7x224xi1>, vector<7x224xf32>
    %cst_73 = arith.constant 1.05070102 : f32
    %133 = vector.broadcast %cst_73 : f32 to vector<7x224xf32>
    %134 = arith.mulf %133, %132 : vector<7x224xf32>
    %c0_74 = arith.constant 0 : index
    %c0_75 = arith.constant 0 : index
    %135 = vector.load %arg7[%c0_74, %c0_75] : memref<1x2xf32, #tpu.memory_space<vmem>>, vector<1x2xf32>
    %136 = vector.extract_strided_slice %134 {offsets = [0, 0], sizes = [1, 224], strides = [1, 1]} : vector<7x224xf32> to vector<1x224xf32>
    %137 = vector.extract_strided_slice %134 {offsets = [1, 0], sizes = [1, 224], strides = [1, 1]} : vector<7x224xf32> to vector<1x224xf32>
    %138 = arith.maximumf %136, %137 : vector<1x224xf32>
    %139 = vector.extract_strided_slice %138 {offsets = [0, 0], sizes = [1, 32], strides = [1, 1]} : vector<1x224xf32> to vector<1x32xf32>
    %140 = vector.extract_strided_slice %138 {offsets = [0, 32], sizes = [1, 32], strides = [1, 1]} : vector<1x224xf32> to vector<1x32xf32>
    %141 = arith.maximumf %139, %140 : vector<1x32xf32>
    %c0_76 = arith.constant 0 : index
    %c0_77 = arith.constant 0 : index
    %c0_78 = arith.constant 0 : index
    %c0_79 = arith.constant 0 : index
    %142 = vector.load %arg6[%c0_76, %c0_77, %c0_78, %c0_79] : memref<3x3x32x2xf32, #tpu.memory_space<vmem>>, vector<1x1x32x2xf32>
    %143 = vector.shape_cast %142 : vector<1x1x32x2xf32> to vector<32x2xf32>
    %cst_80 = arith.constant dense<0.000000e+00> : vector<1x2xf32>
    %144 = tpu.matmul %141, %143, %cst_80 {dimension_numbers = #tpu.dot_dimension_numbers<[1], [0], [0], [1], [0, 0, 1, 1], [], []>} : vector<1x32xf32>, vector<32x2xf32>, vector<1x2xf32> -> vector<1x2xf32>
    %145 = arith.addf %135, %144 : vector<1x2xf32>
    %146 = vector.extract_strided_slice %138 {offsets = [0, 64], sizes = [1, 32], strides = [1, 1]} : vector<1x224xf32> to vector<1x32xf32>
    %147 = vector.extract_strided_slice %138 {offsets = [0, 96], sizes = [1, 32], strides = [1, 1]} : vector<1x224xf32> to vector<1x32xf32>
    %148 = arith.maximumf %146, %147 : vector<1x32xf32>
    %c0_81 = arith.constant 0 : index
    %c1_82 = arith.constant 1 : index
    %c0_83 = arith.constant 0 : index
    %c0_84 = arith.constant 0 : index
    %149 = vector.load %arg6[%c0_81, %c1_82, %c0_83, %c0_84] : memref<3x3x32x2xf32, #tpu.memory_space<vmem>>, vector<1x1x32x2xf32>
    %150 = vector.shape_cast %149 : vector<1x1x32x2xf32> to vector<32x2xf32>
    %cst_85 = arith.constant dense<0.000000e+00> : vector<1x2xf32>
    %151 = tpu.matmul %148, %150, %cst_85 {dimension_numbers = #tpu.dot_dimension_numbers<[1], [0], [0], [1], [0, 0, 1, 1], [], []>} : vector<1x32xf32>, vector<32x2xf32>, vector<1x2xf32> -> vector<1x2xf32>
    %152 = arith.addf %145, %151 : vector<1x2xf32>
    %153 = vector.extract_strided_slice %138 {offsets = [0, 128], sizes = [1, 32], strides = [1, 1]} : vector<1x224xf32> to vector<1x32xf32>
    %154 = vector.extract_strided_slice %138 {offsets = [0, 160], sizes = [1, 32], strides = [1, 1]} : vector<1x224xf32> to vector<1x32xf32>
    %155 = arith.maximumf %153, %154 : vector<1x32xf32>
    %c0_86 = arith.constant 0 : index
    %c2_87 = arith.constant 2 : index
    %c0_88 = arith.constant 0 : index
    %c0_89 = arith.constant 0 : index
    %156 = vector.load %arg6[%c0_86, %c2_87, %c0_88, %c0_89] : memref<3x3x32x2xf32, #tpu.memory_space<vmem>>, vector<1x1x32x2xf32>
    %157 = vector.shape_cast %156 : vector<1x1x32x2xf32> to vector<32x2xf32>
    %cst_90 = arith.constant dense<0.000000e+00> : vector<1x2xf32>
    %158 = tpu.matmul %155, %157, %cst_90 {dimension_numbers = #tpu.dot_dimension_numbers<[1], [0], [0], [1], [0, 0, 1, 1], [], []>} : vector<1x32xf32>, vector<32x2xf32>, vector<1x2xf32> -> vector<1x2xf32>
    %159 = arith.addf %152, %158 : vector<1x2xf32>
    %160 = vector.extract_strided_slice %134 {offsets = [2, 0], sizes = [1, 224], strides = [1, 1]} : vector<7x224xf32> to vector<1x224xf32>
    %161 = vector.extract_strided_slice %134 {offsets = [3, 0], sizes = [1, 224], strides = [1, 1]} : vector<7x224xf32> to vector<1x224xf32>
    %162 = arith.maximumf %160, %161 : vector<1x224xf32>
    %163 = vector.extract_strided_slice %162 {offsets = [0, 0], sizes = [1, 32], strides = [1, 1]} : vector<1x224xf32> to vector<1x32xf32>
    %164 = vector.extract_strided_slice %162 {offsets = [0, 32], sizes = [1, 32], strides = [1, 1]} : vector<1x224xf32> to vector<1x32xf32>
    %165 = arith.maximumf %163, %164 : vector<1x32xf32>
    %c1_91 = arith.constant 1 : index
    %c0_92 = arith.constant 0 : index
    %c0_93 = arith.constant 0 : index
    %c0_94 = arith.constant 0 : index
    %166 = vector.load %arg6[%c1_91, %c0_92, %c0_93, %c0_94] : memref<3x3x32x2xf32, #tpu.memory_space<vmem>>, vector<1x1x32x2xf32>
    %167 = vector.shape_cast %166 : vector<1x1x32x2xf32> to vector<32x2xf32>
    %cst_95 = arith.constant dense<0.000000e+00> : vector<1x2xf32>
    %168 = tpu.matmul %165, %167, %cst_95 {dimension_numbers = #tpu.dot_dimension_numbers<[1], [0], [0], [1], [0, 0, 1, 1], [], []>} : vector<1x32xf32>, vector<32x2xf32>, vector<1x2xf32> -> vector<1x2xf32>
    %169 = arith.addf %159, %168 : vector<1x2xf32>
    %170 = vector.extract_strided_slice %162 {offsets = [0, 64], sizes = [1, 32], strides = [1, 1]} : vector<1x224xf32> to vector<1x32xf32>
    %171 = vector.extract_strided_slice %162 {offsets = [0, 96], sizes = [1, 32], strides = [1, 1]} : vector<1x224xf32> to vector<1x32xf32>
    %172 = arith.maximumf %170, %171 : vector<1x32xf32>
    %c1_96 = arith.constant 1 : index
    %c1_97 = arith.constant 1 : index
    %c0_98 = arith.constant 0 : index
    %c0_99 = arith.constant 0 : index
    %173 = vector.load %arg6[%c1_96, %c1_97, %c0_98, %c0_99] : memref<3x3x32x2xf32, #tpu.memory_space<vmem>>, vector<1x1x32x2xf32>
    %174 = vector.shape_cast %173 : vector<1x1x32x2xf32> to vector<32x2xf32>
    %cst_100 = arith.constant dense<0.000000e+00> : vector<1x2xf32>
    %175 = tpu.matmul %172, %174, %cst_100 {dimension_numbers = #tpu.dot_dimension_numbers<[1], [0], [0], [1], [0, 0, 1, 1], [], []>} : vector<1x32xf32>, vector<32x2xf32>, vector<1x2xf32> -> vector<1x2xf32>
    %176 = arith.addf %169, %175 : vector<1x2xf32>
    %177 = vector.extract_strided_slice %162 {offsets = [0, 128], sizes = [1, 32], strides = [1, 1]} : vector<1x224xf32> to vector<1x32xf32>
    %178 = vector.extract_strided_slice %162 {offsets = [0, 160], sizes = [1, 32], strides = [1, 1]} : vector<1x224xf32> to vector<1x32xf32>
    %179 = arith.maximumf %177, %178 : vector<1x32xf32>
    %c1_101 = arith.constant 1 : index
    %c2_102 = arith.constant 2 : index
    %c0_103 = arith.constant 0 : index
    %c0_104 = arith.constant 0 : index
    %180 = vector.load %arg6[%c1_101, %c2_102, %c0_103, %c0_104] : memref<3x3x32x2xf32, #tpu.memory_space<vmem>>, vector<1x1x32x2xf32>
    %181 = vector.shape_cast %180 : vector<1x1x32x2xf32> to vector<32x2xf32>
    %cst_105 = arith.constant dense<0.000000e+00> : vector<1x2xf32>
    %182 = tpu.matmul %179, %181, %cst_105 {dimension_numbers = #tpu.dot_dimension_numbers<[1], [0], [0], [1], [0, 0, 1, 1], [], []>} : vector<1x32xf32>, vector<32x2xf32>, vector<1x2xf32> -> vector<1x2xf32>
    %183 = arith.addf %176, %182 : vector<1x2xf32>
    %184 = vector.extract_strided_slice %134 {offsets = [4, 0], sizes = [1, 224], strides = [1, 1]} : vector<7x224xf32> to vector<1x224xf32>
    %185 = vector.extract_strided_slice %134 {offsets = [5, 0], sizes = [1, 224], strides = [1, 1]} : vector<7x224xf32> to vector<1x224xf32>
    %186 = arith.maximumf %184, %185 : vector<1x224xf32>
    %187 = vector.extract_strided_slice %186 {offsets = [0, 0], sizes = [1, 32], strides = [1, 1]} : vector<1x224xf32> to vector<1x32xf32>
    %188 = vector.extract_strided_slice %186 {offsets = [0, 32], sizes = [1, 32], strides = [1, 1]} : vector<1x224xf32> to vector<1x32xf32>
    %189 = arith.maximumf %187, %188 : vector<1x32xf32>
    %c2_106 = arith.constant 2 : index
    %c0_107 = arith.constant 0 : index
    %c0_108 = arith.constant 0 : index
    %c0_109 = arith.constant 0 : index
    %190 = vector.load %arg6[%c2_106, %c0_107, %c0_108, %c0_109] : memref<3x3x32x2xf32, #tpu.memory_space<vmem>>, vector<1x1x32x2xf32>
    %191 = vector.shape_cast %190 : vector<1x1x32x2xf32> to vector<32x2xf32>
    %cst_110 = arith.constant dense<0.000000e+00> : vector<1x2xf32>
    %192 = tpu.matmul %189, %191, %cst_110 {dimension_numbers = #tpu.dot_dimension_numbers<[1], [0], [0], [1], [0, 0, 1, 1], [], []>} : vector<1x32xf32>, vector<32x2xf32>, vector<1x2xf32> -> vector<1x2xf32>
    %193 = arith.addf %183, %192 : vector<1x2xf32>
    %194 = vector.extract_strided_slice %186 {offsets = [0, 64], sizes = [1, 32], strides = [1, 1]} : vector<1x224xf32> to vector<1x32xf32>
    %195 = vector.extract_strided_slice %186 {offsets = [0, 96], sizes = [1, 32], strides = [1, 1]} : vector<1x224xf32> to vector<1x32xf32>
    %196 = arith.maximumf %194, %195 : vector<1x32xf32>
    %c2_111 = arith.constant 2 : index
    %c1_112 = arith.constant 1 : index
    %c0_113 = arith.constant 0 : index
    %c0_114 = arith.constant 0 : index
    %197 = vector.load %arg6[%c2_111, %c1_112, %c0_113, %c0_114] : memref<3x3x32x2xf32, #tpu.memory_space<vmem>>, vector<1x1x32x2xf32>
    %198 = vector.shape_cast %197 : vector<1x1x32x2xf32> to vector<32x2xf32>
    %cst_115 = arith.constant dense<0.000000e+00> : vector<1x2xf32>
    %199 = tpu.matmul %196, %198, %cst_115 {dimension_numbers = #tpu.dot_dimension_numbers<[1], [0], [0], [1], [0, 0, 1, 1], [], []>} : vector<1x32xf32>, vector<32x2xf32>, vector<1x2xf32> -> vector<1x2xf32>
    %200 = arith.addf %193, %199 : vector<1x2xf32>
    %201 = vector.extract_strided_slice %186 {offsets = [0, 128], sizes = [1, 32], strides = [1, 1]} : vector<1x224xf32> to vector<1x32xf32>
    %202 = vector.extract_strided_slice %186 {offsets = [0, 160], sizes = [1, 32], strides = [1, 1]} : vector<1x224xf32> to vector<1x32xf32>
    %203 = arith.maximumf %201, %202 : vector<1x32xf32>
    %c2_116 = arith.constant 2 : index
    %c2_117 = arith.constant 2 : index
    %c0_118 = arith.constant 0 : index
    %c0_119 = arith.constant 0 : index
    %204 = vector.load %arg6[%c2_116, %c2_117, %c0_118, %c0_119] : memref<3x3x32x2xf32, #tpu.memory_space<vmem>>, vector<1x1x32x2xf32>
    %205 = vector.shape_cast %204 : vector<1x1x32x2xf32> to vector<32x2xf32>
    %cst_120 = arith.constant dense<0.000000e+00> : vector<1x2xf32>
    %206 = tpu.matmul %203, %205, %cst_120 {dimension_numbers = #tpu.dot_dimension_numbers<[1], [0], [0], [1], [0, 0, 1, 1], [], []>} : vector<1x32xf32>, vector<32x2xf32>, vector<1x2xf32> -> vector<1x2xf32>
    %207 = arith.addf %200, %206 : vector<1x2xf32>
    %c0_121 = arith.constant 0 : index
    %c0_122 = arith.constant 0 : index
    %c0_123 = arith.constant 0 : index
    %208 = vector.load %arg8[%c0_121, %c0_122, %c0_123] : memref<1x1x2xf32, #tpu.memory_space<vmem>>, vector<1x1x2xf32>
    %209 = vector.shape_cast %208 : vector<1x1x2xf32> to vector<1x2xf32>
    %210 = vector.shape_cast %207 : vector<1x2xf32> to vector<1x1x2xf32>
    tpu.vector_store %arg8[%c0_121, %c0_122, %c0_123], %210 {strides = array<i32>} : memref<1x1x2xf32, #tpu.memory_space<vmem>>, vector<1x1x2xf32>,
    return
  }
  func.func @transform_0(%arg0: i32) -> (i32, i32, i32) {
    %c0_i32 = arith.constant 0 : i32
    %c0_i32_0 = arith.constant 0 : i32
    %c0_i32_1 = arith.constant 0 : i32
    return %arg0, %c0_i32, %c0_i32_0 : i32, i32, i32
  }
  func.func @transform_1(%arg0: i32) -> (i32, i32, i32) {
    %c0_i32 = arith.constant 0 : i32
    %c0_i32_0 = arith.constant 0 : i32
    %c0_i32_1 = arith.constant 0 : i32
    %c0_i32_2 = arith.constant 0 : i32
    return %c0_i32, %c0_i32_0, %c0_i32_1 : i32, i32, i32
  }
  func.func @transform_2(%arg0: i32) -> (i32, i32) {
    %c0_i32 = arith.constant 0 : i32
    %c0_i32_0 = arith.constant 0 : i32
    %c0_i32_1 = arith.constant 0 : i32
    return %c0_i32, %c0_i32_0 : i32, i32
  }
  func.func @transform_3(%arg0: i32) -> (i32, i32, i32) {
    %c0_i32 = arith.constant 0 : i32
    %c0_i32_0 = arith.constant 0 : i32
    %c0_i32_1 = arith.constant 0 : i32
    %c0_i32_2 = arith.constant 0 : i32
    return %c0_i32, %c0_i32_0, %c0_i32_1 : i32, i32, i32
  }
  func.func @transform_4(%arg0: i32) -> (i32, i32) {
    %c0_i32 = arith.constant 0 : i32
    %c0_i32_0 = arith.constant 0 : i32
    %c0_i32_1 = arith.constant 0 : i32
    return %c0_i32, %c0_i32_0 : i32, i32
  }
  func.func @transform_5(%arg0: i32) -> (i32, i32, i32, i32) {
    %c0_i32 = arith.constant 0 : i32
    %c0_i32_0 = arith.constant 0 : i32
    %c0_i32_1 = arith.constant 0 : i32
    %c0_i32_2 = arith.constant 0 : i32
    %c0_i32_3 = arith.constant 0 : i32
    return %c0_i32, %c0_i32_0, %c0_i32_1, %c0_i32_2 : i32, i32, i32, i32
  }
  func.func @transform_6(%arg0: i32) -> (i32, i32) {
    %c0_i32 = arith.constant 0 : i32
    %c0_i32_0 = arith.constant 0 : i32
    %c0_i32_1 = arith.constant 0 : i32
    return %c0_i32, %c0_i32_0 : i32, i32
  }
  func.func @transform_7(%arg0: i32) -> (i32, i32, i32) {
    %c0_i32 = arith.constant 0 : i32
    %c0_i32_0 = arith.constant 0 : i32
    %c0_i32_1 = arith.constant 0 : i32
    return %arg0, %c0_i32, %c0_i32_0 : i32, i32, i32
  }
}

</mosaic_0001>

<llo_original>
// kernel: tile.13
$region0: #{tile.13}
  #allocation0 [shape = 's32[1]{0}', space=sflag, size = 0x4, scoped, tag = 'scoped memory for tile.13']
  %s0 = inlined_call_operand.vmem [shape: f32[16], index: 0, kind: input, shape index: {}]
  %s1 = inlined_call_operand.vmem [shape: f32[15,16], index: 1, kind: output, shape index: {}]
  // Predicated region
  $region2: #{tile.13} parent=0 // pred_check
    _
  $region3: #{tile.13} parent=0 // pred_check_branch
    %3 = sbr.rel (0) target = $region5
  $region4: #{tile.13} parent=0 // pred_region
    _
  $region5: #{tile.13} parent=0 // pred_fallthru
    _
  %v4 = vld [vmem:[%s0] ss:$0 sm:$0xff]
  %5 = vst [vmem:[%s1] sm:$0xff] %v4
  %s6 = scalar_lea.vmem %s1, 8
  %7 = vst [vmem:[%s6] sm:$0xff] %v4

// kernel: tile.14
$region0: #{tile.14}
  %s0 = inlined_call_operand.vmem [shape: f32[15,16], index: 0, kind: input, shape index: {}]
  %s1 = inlined_call_operand.vmem [shape: f32[1,240], index: 1, kind: output, shape index: {}]
  $region1: #{tile.14} parent=0
    #allocation0 [shape = 'u8[8192]{0}', space=vmem, size = 0x2000, scoped, tag = 'scoped mem for output reshape']
    %s2 = smov 3
    %v3 = vld [vmem:[%s0] ss:$8 sm:%s2]
    %vm4 = vcmask 130048
    %5 = vst.msk [vmem:[#allocation0] ss:$8 sm:$0x3] %vm4, %v3
    %s6 = scalar_lea.vmem %s0, 7
    %v7 = vld [vmem:[%s6] sm:$0x1]
    %8 = vrot.lane.b32.xlu0 %v7, 112
    %v9 = vpop.permute.xlu0 %8
    %vm10 = vcmask 1048448
    %11 = vst.msk [vmem:[#allocation0] sm:$0x1] %vm10, %v9
    %s12 = scalar_lea.vmem %s0, 6
    %s13 = smov 3
    %v14 = vld [vmem:[%s12] ss:$8 sm:%s13]
    %15 = vrot.lane.b32.xlu0 %v14, 96
    %v16 = vpop.permute.xlu0 %15
    %vm17 = vcmask 917248
    %18 = vst.msk [vmem:[#allocation0] ss:$8 sm:$0x3] %vm17, %v16
    %s19 = scalar_lea.vmem %s0, 5
    %s20 = smov 3
    %v21 = vld [vmem:[%s19] ss:$8 sm:%s20]
    %22 = vrot.lane.b32.xlu0 %v21, 80
    %v23 = vpop.permute.xlu0 %22
    %vm24 = vcmask 786048
    %25 = vst.msk [vmem:[#allocation0] ss:$8 sm:$0x3] %vm24, %v23
    %s26 = scalar_lea.vmem %s0, 4
    %s27 = smov 3
    %v28 = vld [vmem:[%s26] ss:$8 sm:%s27]
    %29 = vrot.lane.b32.xlu0 %v28, 64
    %v30 = vpop.permute.xlu0 %29
    %vm31 = vcmask 654848
    %32 = vst.msk [vmem:[#allocation0] ss:$8 sm:$0x3] %vm31, %v30
    %s33 = scalar_lea.vmem %s0, 3
    %s34 = smov 3
    %v35 = vld [vmem:[%s33] ss:$8 sm:%s34]
    %36 = vrot.lane.b32.xlu0 %v35, 48
    %v37 = vpop.permute.xlu0 %36
    %vm38 = vcmask 523648
    %39 = vst.msk [vmem:[#allocation0] ss:$8 sm:$0x3] %vm38, %v37
    %s40 = scalar_lea.vmem %s0, 2
    %s41 = smov 3
    %v42 = vld [vmem:[%s40] ss:$8 sm:%s41]
    %43 = vrot.lane.b32.xlu0 %v42, 32
    %v44 = vpop.permute.xlu0 %43
    %vm45 = vcmask 392448
    %46 = vst.msk [vmem:[#allocation0] ss:$8 sm:$0x3] %vm45, %v44
    %s47 = scalar_lea.vmem %s0, 1
    %s48 = smov 3
    %v49 = vld [vmem:[%s47] ss:$8 sm:%s48]
    %50 = vrot.lane.b32.xlu0 %v49, 16
    %v51 = vpop.permute.xlu0 %50
    %vm52 = vcmask 261248
    %53 = vst.msk [vmem:[#allocation0] ss:$8 sm:$0x3] %vm52, %v51
    %s55 = sshllo.u32 0, 1
    %v57 = vld [vmem:[#allocation0] sm:%s55]
    %s58 = sshllo.u32 0, 1
    %59 = vst [vmem:[%s1] sm:%s58] %v57
    %s60 = scalar_lea.vmem [#allocation0], 8
    %v61 = vld [vmem:[%s60] sm:%s55]
    %s62 = sshllo.u32 0, 1
    %s63 = scalar_lea.vmem %s1, 1
    %64 = vst [vmem:[%s63] sm:%s62] %v61

// kernel: tile.18
$region0: #{tile.18}
  #allocation0 [shape = 's32[1]{0}', space=sflag, size = 0x4, scoped, tag = 'scoped memory for tile.18']
  %s0 = inlined_call_operand.vmem [shape: f32[32], index: 0, kind: input, shape index: {}]
  %s1 = inlined_call_operand.vmem [shape: f32[7,32], index: 1, kind: output, shape index: {}]
  // Predicated region
  $region2: #{tile.18} parent=0 // pred_check
    _
  $region3: #{tile.18} parent=0 // pred_check_branch
    %3 = sbr.rel (0) target = $region5
  $region4: #{tile.18} parent=0 // pred_region
    _
  $region5: #{tile.18} parent=0 // pred_fallthru
    _
  %v4 = vld [vmem:[%s0] ss:$0 sm:$0xff]
  %5 = vst [vmem:[%s1] sm:$0xff] %v4

// kernel: tile.19
$region0: #{tile.19}
  %s0 = inlined_call_operand.vmem [shape: f32[7,32], index: 0, kind: input, shape index: {}]
  %s1 = inlined_call_operand.vmem [shape: f32[1,224], index: 1, kind: output, shape index: {}]
  $region1: #{tile.19} parent=0
    #allocation0 [shape = 'u8[8192]{0}', space=vmem, size = 0x2000, scoped, tag = 'scoped mem for output reshape']
    %s2 = smov 3
    %v3 = vld [vmem:[%s0] ss:$4 sm:%s2]
    %vm4 = vcmask 261120
    %5 = vst.msk [vmem:[#allocation0] ss:$8 sm:$0x3] %vm4, %v3
    %s6 = scalar_lea.vmem %s0, 3
    %v7 = vld [vmem:[%s6] sm:$0x1]
    %8 = vrot.lane.b32.xlu0 %v7, 96
    %v9 = vpop.permute.xlu0 %8
    %vm10 = vcmask 1048320
    %11 = vst.msk [vmem:[#allocation0] sm:$0x1] %vm10, %v9
    %s12 = scalar_lea.vmem %s0, 2
    %s13 = smov 3
    %v14 = vld [vmem:[%s12] ss:$4 sm:%s13]
    %15 = vrot.lane.b32.xlu0 %v14, 64
    %v16 = vpop.permute.xlu0 %15
    %vm17 = vcmask 785920
    %18 = vst.msk [vmem:[#allocation0] ss:$8 sm:$0x3] %vm17, %v16
    %s19 = scalar_lea.vmem %s0, 1
    %s20 = smov 3
    %v21 = vld [vmem:[%s19] ss:$4 sm:%s20]
    %22 = vrot.lane.b32.xlu0 %v21, 32
    %v23 = vpop.permute.xlu0 %22
    %vm24 = vcmask 523520
    %25 = vst.msk [vmem:[#allocation0] ss:$8 sm:$0x3] %vm24, %v23
    %s27 = sshllo.u32 0, 1
    %v29 = vld [vmem:[#allocation0] sm:%s27]
    %s30 = sshllo.u32 0, 1
    %31 = vst [vmem:[%s1] sm:%s30] %v29
    %s32 = scalar_lea.vmem [#allocation0], 8
    %v33 = vld [vmem:[%s32] sm:%s27]
    %s34 = sshllo.u32 0, 1
    %s35 = scalar_lea.vmem %s1, 1
    %36 = vst [vmem:[%s35] sm:%s34] %v33

// kernel: convtransposenet_forward.1
$region0: #{convtransposenet_forward.1}
  #allocation0 [shape = 'u32[]', space=smem, size = 0x4, offset = 0x4, fixed_abs, tag = 'smem constant byte address 0x4 - core index']
  #allocation1 [shape = 'u32[144,128]{1,0:T(1,128)}', space=vmem, size = 0x12000, scoped, tag = 'internal scratch']
  #allocation2 [shape = 'f32[7,240]{1,0:T(8,128)}', space=vmem, size = 0x2000, scoped, tag = 'scratch operand']
  #allocation3 [shape = 'f32[11,112]{1,0:T(8,128)}', space=vmem, size = 0x2000, scoped, tag = 'scratch operand']
  %s0 = inlined_call_operand.vmem [shape: f32[2,18,32], index: 0, kind: input, shape index: {}]
  %s1 = inlined_call_operand.vmem [shape: f32[4,32,240], index: 1, kind: input, shape index: {}]
  %s2 = inlined_call_operand.vmem [shape: f32[1,240], index: 2, kind: input, shape index: {}]
  %s3 = inlined_call_operand.vmem [shape: f32[5,112,224], index: 3, kind: input, shape index: {}]
  %s4 = inlined_call_operand.vmem [shape: f32[1,224], index: 4, kind: input, shape index: {}]
  %s5 = inlined_call_operand.vmem [shape: f32[3,3,32,2], index: 5, kind: input, shape index: {}]
  %s6 = inlined_call_operand.vmem [shape: f32[1,2], index: 6, kind: input, shape index: {}]
  %s7 = inlined_call_operand.vmem [shape: f32[2,1,2], index: 7, kind: output, shape index: {}]
  %s8 = sld [smem:[#allocation0]]
  $region61: #{convtransposenet_forward.1} parent=0
    _
  %s10 = ssub.s32 1, %s8
  %s11 = scalar_select 0, %s10, %s8
  loop: start=0, step=1, limit=4
  $region2: #{convtransposenet_forward.1} parent=0 // loop_pre_header
    _
  $region3: #{convtransposenet_forward.1} parent=0 // loop_header
    %s13 = sphi 0, %s17
    %p14 = scmp.ge.s32.totalorder %s13, 4
    %s23 = sphi 0, %s25
    %s26 = sphi 0, %s23
    %s27 = sphi 0, %s26
    %s43 = sphi 0, %s27
    %s47 = sphi 0, %s47
    %s49 = sphi 0, %s47
    %s50 = sphi 0, %s49
    %s64 = sphi 0, %s50
    %s68 = sphi 0, %s68
    %s70 = sphi 0, %s68
    %s71 = sphi 0, %s70
    %s85 = sphi 0, %s71
    %s89 = sphi 0, %s89
    %s91 = sphi 0, %s89
    %s92 = sphi 0, %s91
    %s106 = sphi 0, %s92
    %s110 = sphi 0, %s110
    %s112 = sphi 0, %s110
    %s113 = sphi 0, %s112
    %s127 = sphi 0, %s113
    %s131 = sphi 0, %s131
    %s133 = sphi 0, %s131
    %s134 = sphi 0, %s133
    %s148 = sphi 0, %s134
    %s152 = sphi 0, %s152
    %s154 = sphi 0, %s152
    %s155 = sphi 0, %s154
    %s169 = sphi 0, %s155
    %s175 = sphi 0, %s177
    %s178 = sphi 0, %s175
    %s179 = sphi 0, %s178
    %s195 = sphi 0, %s179
  $region4: #{convtransposenet_forward.1} parent=0 // loop_header_branch
    %16 = sbr.rel (%p14) target = $region8
  $region5: #{convtransposenet_forward.1} parent=0 // loop_body
    %s18 = ssub.s32 %s13, 1
    %s19 = ssub.s32 %s13, 2
    %s20 = sadd.s32 %s13, 1
    %s21 = ssub.s32 %s13, %s20
    %p22 = scmp.eq.s32.totalorder %s21, 0
    %s24 = sadd.s32 %s23, 1
    %s25 = scalar_select %p22, %s23, %s24
    %p28 = pneg %p22
    %p29 = scmp.eq.s32.totalorder %s13, 1
    %p30 = por %p28, %p29
    %p31 = scmp.ne.s32.totalorder %s23, %s26
    %p32 = scmp.eq.s32.totalorder %s13, 0
    %p33 = por %p31, %p32
    %p34 = scmp.ne.s32.totalorder %s23, %s26
    %p35 = scmp.eq.s32.totalorder %s18, 1
    %p36 = por %p34, %p35
    %p37 = scmp.ne.s32.totalorder %s26, %s27
    %p38 = scmp.eq.s32.totalorder %s18, 0
    %p39 = por %p37, %p38
    %p40 = scmp.ne.s32.totalorder %s26, %s27
    %p41 = scmp.eq.s32.totalorder %s19, 1
    %p42 = por %p40, %p41
    %p44 = scmp.ne.s32.totalorder %s27, %s43
    %p45 = scmp.eq.s32.totalorder %s19, 0
    %p46 = por %p44, %p45
    %s48 = sadd.s32 %s47, 1
    %p51 = scmp.eq.s32.totalorder %s13, 1
    %p52 = scmp.ne.s32.totalorder %s47, %s49
    %p53 = scmp.eq.s32.totalorder %s13, 0
    %p54 = por %p52, %p53
    %p55 = scmp.ne.s32.totalorder %s47, %s49
    %p56 = scmp.eq.s32.totalorder %s18, 1
    %p57 = por %p55, %p56
    %p58 = scmp.ne.s32.totalorder %s49, %s50
    %p59 = scmp.eq.s32.totalorder %s18, 0
    %p60 = por %p58, %p59
    %p61 = scmp.ne.s32.totalorder %s49, %s50
    %p62 = scmp.eq.s32.totalorder %s19, 1
    %p63 = por %p61, %p62
    %p65 = scmp.ne.s32.totalorder %s50, %s64
    %p66 = scmp.eq.s32.totalorder %s19, 0
    %p67 = por %p65, %p66
    %s69 = sadd.s32 %s68, 1
    %p72 = scmp.eq.s32.totalorder %s13, 1
    %p73 = scmp.ne.s32.totalorder %s68, %s70
    %p74 = scmp.eq.s32.totalorder %s13, 0
    %p75 = por %p73, %p74
    %p76 = scmp.ne.s32.totalorder %s68, %s70
    %p77 = scmp.eq.s32.totalorder %s18, 1
    %p78 = por %p76, %p77
    %p79 = scmp.ne.s32.totalorder %s70, %s71
    %p80 = scmp.eq.s32.totalorder %s18, 0
    %p81 = por %p79, %p80
    %p82 = scmp.ne.s32.totalorder %s70, %s71
    %p83 = scmp.eq.s32.totalorder %s19, 1
    %p84 = por %p82, %p83
    %p86 = scmp.ne.s32.totalorder %s71, %s85
    %p87 = scmp.eq.s32.totalorder %s19, 0
    %p88 = por %p86, %p87
    %s90 = sadd.s32 %s89, 1
    %p93 = scmp.eq.s32.totalorder %s13, 1
    %p94 = scmp.ne.s32.totalorder %s89, %s91
    %p95 = scmp.eq.s32.totalorder %s13, 0
    %p96 = por %p94, %p95
    %p97 = scmp.ne.s32.totalorder %s89, %s91
    %p98 = scmp.eq.s32.totalorder %s18, 1
    %p99 = por %p97, %p98
    %p100 = scmp.ne.s32.totalorder %s91, %s92
    %p101 = scmp.eq.s32.totalorder %s18, 0
    %p102 = por %p100, %p101
    %p103 = scmp.ne.s32.totalorder %s91, %s92
    %p104 = scmp.eq.s32.totalorder %s19, 1
    %p105 = por %p103, %p104
    %p107 = scmp.ne.s32.totalorder %s92, %s106
    %p108 = scmp.eq.s32.totalorder %s19, 0
    %p109 = por %p107, %p108
    %s111 = sadd.s32 %s110, 1
    %p114 = scmp.eq.s32.totalorder %s13, 1
    %p115 = scmp.ne.s32.totalorder %s110, %s112
    %p116 = scmp.eq.s32.totalorder %s13, 0
    %p117 = por %p115, %p116
    %p118 = scmp.ne.s32.totalorder %s110, %s112
    %p119 = scmp.eq.s32.totalorder %s18, 1
    %p120 = por %p118, %p119
    %p121 = scmp.ne.s32.totalorder %s112, %s113
    %p122 = scmp.eq.s32.totalorder %s18, 0
    %p123 = por %p121, %p122
    %p124 = scmp.ne.s32.totalorder %s112, %s113
    %p125 = scmp.eq.s32.totalorder %s19, 1
    %p126 = por %p124, %p125
    %p128 = scmp.ne.s32.totalorder %s113, %s127
    %p129 = scmp.eq.s32.totalorder %s19, 0
    %p130 = por %p128, %p129
    %s132 = sadd.s32 %s131, 1
    %p135 = scmp.eq.s32.totalorder %s13, 1
    %p136 = scmp.ne.s32.totalorder %s131, %s133
    %p137 = scmp.eq.s32.totalorder %s13, 0
    %p138 = por %p136, %p137
    %p139 = scmp.ne.s32.totalorder %s131, %s133
    %p140 = scmp.eq.s32.totalorder %s18, 1
    %p141 = por %p139, %p140
    %p142 = scmp.ne.s32.totalorder %s133, %s134
    %p143 = scmp.eq.s32.totalorder %s18, 0
    %p144 = por %p142, %p143
    %p145 = scmp.ne.s32.totalorder %s133, %s134
    %p146 = scmp.eq.s32.totalorder %s19, 1
    %p147 = por %p145, %p146
    %p149 = scmp.ne.s32.totalorder %s134, %s148
    %p150 = scmp.eq.s32.totalorder %s19, 0
    %p151 = por %p149, %p150
    %s153 = sadd.s32 %s152, 1
    %p156 = scmp.eq.s32.totalorder %s13, 1
    %p157 = scmp.ne.s32.totalorder %s152, %s154
    %p158 = scmp.eq.s32.totalorder %s13, 0
    %p159 = por %p157, %p158
    %p160 = scmp.ne.s32.totalorder %s152, %s154
    %p161 = scmp.eq.s32.totalorder %s18, 1
    %p162 = por %p160, %p161
    %p163 = scmp.ne.s32.totalorder %s154, %s155
    %p164 = scmp.eq.s32.totalorder %s18, 0
    %p165 = por %p163, %p164
    %p166 = scmp.ne.s32.totalorder %s154, %s155
    %p167 = scmp.eq.s32.totalorder %s19, 1
    %p168 = por %p166, %p167
    %p170 = scmp.ne.s32.totalorder %s155, %s169
    %p171 = scmp.eq.s32.totalorder %s19, 0
    %p172 = por %p170, %p171
    %s173 = ssub.s32 %s13, %s20
    %p174 = scmp.eq.s32.totalorder %s173, 0
    %s176 = sadd.s32 %s175, 1
    %s177 = scalar_select %p174, %s175, %s176
    %p180 = pneg %p174
    %p181 = scmp.eq.s32.totalorder %s13, 1
    %p182 = por %p180, %p181
    %p183 = scmp.ne.s32.totalorder %s175, %s178
    %p184 = scmp.eq.s32.totalorder %s13, 0
    %p185 = por %p183, %p184
    %p186 = scmp.ne.s32.totalorder %s175, %s178
    %p187 = scmp.eq.s32.totalorder %s18, 1
    %p188 = por %p186, %p187
    %p189 = scmp.ne.s32.totalorder %s178, %s179
    %p190 = scmp.eq.s32.totalorder %s18, 0
    %p191 = por %p189, %p190
    %p192 = scmp.ne.s32.totalorder %s178, %s179
    %p193 = scmp.eq.s32.totalorder %s19, 1
    %p194 = por %p192, %p193
    %p196 = scmp.ne.s32.totalorder %s179, %s195
    %p197 = scmp.eq.s32.totalorder %s19, 0
    %p198 = por %p196, %p197
    %p199 = scmp.le.s32.totalorder 1, %s13
    %p200 = scmp.lt.s32.totalorder %s13, 3
    %p201 = pnand %p199, %p200
    %p202 = pneg %p201
    // Predicated region
    $region9: #{convtransposenet_forward.1} parent=5 // pred_check
      _
    $region10: #{convtransposenet_forward.1} parent=5 // pred_check_branch
      %204 = sbr.rel (%p201) target = $region12
    $region11: #{convtransposenet_forward.1} parent=5 // pred_region
      %s205 = ssub.s32 %s13, 1
      // Predicated region
      $region13: #{convtransposenet_forward.1} parent=11 // pred_check
        %p206 = pneg %p60
      $region14: #{convtransposenet_forward.1} parent=11 // pred_check_branch
        %208 = sbr.rel (%p206) target = $region16
      $region15: #{convtransposenet_forward.1} parent=11 // pred_region
        _
      $region16: #{convtransposenet_forward.1} parent=11 // pred_fallthru
        _
      // Predicated region
      $region17: #{convtransposenet_forward.1} parent=11 // pred_check
        %p209 = pneg %p81
      $region18: #{convtransposenet_forward.1} parent=11 // pred_check_branch
        %211 = sbr.rel (%p209) target = $region20
      $region19: #{convtransposenet_forward.1} parent=11 // pred_region
        _
      $region20: #{convtransposenet_forward.1} parent=11 // pred_fallthru
        _
      // Predicated region
      $region21: #{convtransposenet_forward.1} parent=11 // pred_check
        %p212 = pneg %p102
      $region22: #{convtransposenet_forward.1} parent=11 // pred_check_branch
        %214 = sbr.rel (%p212) target = $region24
      $region23: #{convtransposenet_forward.1} parent=11 // pred_region
        _
      $region24: #{convtransposenet_forward.1} parent=11 // pred_fallthru
        _
      // Predicated region
      $region25: #{convtransposenet_forward.1} parent=11 // pred_check
        %p215 = pneg %p123
      $region26: #{convtransposenet_forward.1} parent=11 // pred_check_branch
        %217 = sbr.rel (%p215) target = $region28
      $region27: #{convtransposenet_forward.1} parent=11 // pred_region
        _
      $region28: #{convtransposenet_forward.1} parent=11 // pred_fallthru
        _
      // Predicated region
      $region29: #{convtransposenet_forward.1} parent=11 // pred_check
        %p218 = pneg %p144
      $region30: #{convtransposenet_forward.1} parent=11 // pred_check_branch
        %220 = sbr.rel (%p218) target = $region32
      $region31: #{convtransposenet_forward.1} parent=11 // pred_region
        _
      $region32: #{convtransposenet_forward.1} parent=11 // pred_fallthru
        _
      // Predicated region
      $region33: #{convtransposenet_forward.1} parent=11 // pred_check
        %p221 = pneg %p165
      $region34: #{convtransposenet_forward.1} parent=11 // pred_check_branch
        %223 = sbr.rel (%p221) target = $region36
      $region35: #{convtransposenet_forward.1} parent=11 // pred_region
        _
      $region36: #{convtransposenet_forward.1} parent=11 // pred_fallthru
        _
    $region12: #{convtransposenet_forward.1} parent=5 // pred_fallthru
      _
    %p224 = scmp.lt.s32.totalorder %s13, 2
    // Predicated region
    $region37: #{convtransposenet_forward.1} parent=5 // pred_check
      %p225 = pneg %p224
    $region38: #{convtransposenet_forward.1} parent=5 // pred_check_branch
      %227 = sbr.rel (%p225) target = $region40
    $region39: #{convtransposenet_forward.1} parent=5 // pred_region
      // Predicated region
      $region41: #{convtransposenet_forward.1} parent=39 // pred_check
        %p228 = pneg %p33
      $region42: #{convtransposenet_forward.1} parent=39 // pred_check_branch
        %230 = sbr.rel (%p228) target = $region44
      $region43: #{convtransposenet_forward.1} parent=39 // pred_region
        %p231 = scmp.lt.s32.totalorder %s13, 1
        %s232 = scalar_select %p231, %s13, 1
        %s233 = smul.addr %s232, 3
        %s234 = smul.addr %s233, 8
        %s235 = scalar_lea.vmem %s0, %s234
      $region44: #{convtransposenet_forward.1} parent=39 // pred_fallthru
        _
    $region40: #{convtransposenet_forward.1} parent=5 // pred_fallthru
      _
    %p236 = scmp.le.s32.totalorder 1, %s13
    %p237 = scmp.lt.s32.totalorder %s13, 3
    %p238 = pnand %p236, %p237
    %p239 = pneg %p238
    // Predicated region
    $region45: #{convtransposenet_forward.1} parent=5 // pred_check
      _
    $region46: #{convtransposenet_forward.1} parent=5 // pred_check_branch
      %241 = sbr.rel (%p238) target = $region48
    $region47: #{convtransposenet_forward.1} parent=5 // pred_region
      %s242 = ssub.s32 %s13, 1
      %p243 = scmp.lt.s32.totalorder %s18, 1
      %s244 = scalar_select %p243, %s18, 1
      %s245 = smul.addr %s244, 3
      %s246 = smul.addr %s245, 8
      %s247 = scalar_lea.vmem %s0, %s246
      %p248 = pneg %p39
      %p249 = pneg %p36
      %p250 = pneg %p60
      %p251 = pneg %p57
      %p252 = pneg %p81
      %p253 = pneg %p78
      %p254 = pneg %p102
      %p255 = pneg %p99
      %p256 = pneg %p123
      %p257 = pneg %p120
      %p258 = pneg %p144
      %p259 = pneg %p141
      %p260 = pneg %p165
      %p261 = pneg %p162
      %p262 = pneg %p191
      %p263 = pneg %p188
      %p264 = scmp.lt.s32.totalorder %s18, 1
      %s265 = scalar_select %p264, %s18, 1
      %s266 = scalar_lea.vmem %s7, %s265
      %p267 = scmp.lt.s32.totalorder %s18, 1
      %s268 = scalar_select %p267, %s18, 1
      %s269 = smul.addr %s268, 3
      %s270 = smul.addr %s269, 8
      %s271 = scalar_lea.vmem %s0, %s270
      %p272 = scmp.lt.s32.totalorder %s18, 1
      %s273 = scalar_select %p272, %s18, 1
      %s274 = scalar_lea.vmem %s7, %s273
      %v275 = vld [vmem:[%s271] sm:$0xff]
      %v276 = vld [vmem:[%s271 + $0x8] sm:$0xff]
      %v277 = vld [vmem:[%s271 + $0x10] sm:$0x3]
      %v278 = vld [vmem:[%s1] sm:$0xff]
      %v279 = vld [vmem:[%s1 + $0x8] sm:$0xff]
      %v280 = vld [vmem:[%s1 + $0x10] sm:$0xff]
      %v281 = vld [vmem:[%s1 + $0x18] sm:$0xff]
      %v282 = vld [vmem:[%s1 + $0x20] sm:$0xff]
      %v283 = vld [vmem:[%s1 + $0x28] sm:$0xff]
      %v284 = vld [vmem:[%s1 + $0x30] sm:$0xff]
      %v285 = vld [vmem:[%s1 + $0x38] sm:$0xff]
      %s286 = scalar_lea.vmem %s1, 64
      %v287 = vld [vmem:[%s286] sm:$0xff]
      %v288 = vld [vmem:[%s286 + $0x8] sm:$0xff]
      %v289 = vld [vmem:[%s286 + $0x10] sm:$0xff]
      %v290 = vld [vmem:[%s286 + $0x18] sm:$0xff]
      %v291 = vld [vmem:[%s286 + $0x20] sm:$0xff]
      %v292 = vld [vmem:[%s286 + $0x28] sm:$0xff]
      %v293 = vld [vmem:[%s286 + $0x30] sm:$0xff]
      %v294 = vld [vmem:[%s286 + $0x38] sm:$0xff]
      %vm297 = vcmask 1046528
      %v298 = vrot.slane %v275, 1
      %v299 = vrot.slane %v276, 1
      %v300 = vsel %vm297, %v298, %v299
      %vm301 = vcmask 261120
      %v302 = vsel %vm301, %v300, 0
      %v304 = vsel %vm301, %v299, 0
      %306 = vmatprep.subr.mxu0 %v288
      %307 = vmatpush1.msra.mxu0 %v287
      %308 = vmatprep.subr.mxu0 %v290
      %309 = vmatpush1.msra.mxu0 %v289
      %310 = vmatprep.subr.mxu0 %v292
      %311 = vmatpush1.msra.mxu0 %v291
      %312 = vmatprep.subr.mxu0 %v294
      %313 = vmatpush1.msra.mxu0 %v293
      %314 = vmatprep.subr.mxu0 0.0
      %315 = vmatpush1.msra.mxu0 0.0
      %316 = vmatprep.subr.mxu0 0.0
      %317 = vmatpush1.msra.mxu0 0.0
      %318 = vmatprep.subr.mxu0 0.0
      %319 = vmatpush1.msra.mxu0 0.0
      %320 = vmatprep.subr.mxu0 0.0
      %321 = vmatpush1.msra.mxu0 0.0
      %322 = vmatprep.subr.mxu0 0.0
      %323 = vmatpush1.msra.mxu0 0.0
      %324 = vmatprep.subr.mxu0 0.0
      %325 = vmatpush1.msra.mxu0 0.0
      %326 = vmatprep.subr.mxu0 0.0
      %327 = vmatpush1.msra.mxu0 0.0
      %328 = vmatprep.subr.mxu0 0.0
      %329 = vmatpush1.msra.mxu0 0.0
      %330 = vmatprep.subr.mxu0 0.0
      %331 = vmatpush1.msra.mxu0 0.0
      %332 = vmatprep.subr.mxu0 0.0
      %333 = vmatpush1.msra.mxu0 0.0
      %334 = vmatprep.subr.mxu0 0.0
      %335 = vmatpush1.msra.mxu0 0.0
      %336 = vmatprep.subr.mxu0 0.0
      %337 = vmatpush1.msra.mxu0 0.0
      %338 = vmatprep.subr.mxu0 0.0
      %339 = vmatpush1.msra.mxu0 0.0
      %340 = vmatprep.subr.mxu0 0.0
      %341 = vmatpush1.msra.mxu0 0.0
      %342 = vmatprep.subr.mxu0 0.0
      %343 = vmatpush1.msra.mxu0 0.0
      %344 = vmatprep.subr.mxu0 0.0
      %345 = vmatpush1.msra.mxu0 0.0
      %346 = vmatprep.subr.mxu0 0.0
      %347 = vmatpush1.msra.mxu0 0.0
      %348 = vmatprep.subr.mxu0 0.0
      %349 = vmatpush1.msra.mxu0 0.0
      %350 = vmatprep.subr.mxu0 0.0
      %351 = vmatpush1.msra.mxu0 0.0
      %352 = vmatprep.subr.mxu0 0.0
      %353 = vmatpush1.msra.mxu0 0.0
      %354 = vmatprep.subr.mxu0 0.0
      %355 = vmatpush1.msra.mxu0 0.0
      %356 = vmatprep.subr.mxu0 0.0
      %357 = vmatpush1.msra.mxu0 0.0
      %358 = vmatprep.subr.mxu0 0.0
      %359 = vmatpush1.msra.mxu0 0.0
      %360 = vmatprep.subr.mxu0 0.0
      %361 = vmatpush1.msra.mxu0 0.0
      %362 = vmatprep.subr.mxu0 0.0
      %363 = vmatpush1.msra.mxu0 0.0
      %364 = vmatprep.subr.mxu0 0.0
      %365 = vmatpush1.msra.mxu0 0.0
      %366 = vmatprep.subr.mxu0 0.0
      %367 = vmatpush1.msra.mxu0 0.0
      %368 = vmatprep.subr.mxu0 0.0
      %369 = vmatpush1.msra.mxu0 0.0
      %370 = vmatprep.mubr.f32.mxu0 0.0
      %371 = vmatmul.mubr.f32.gmra.mrb[0].mxu0 %v302
      %v372 = vpop.f32.mrb[0].mxu0
      %v373 = vadd.f32 0.0, %v372
      %v374 = vpop.f32.mrb[0].mxu0
      %v375 = vadd.f32 0.0, %v374
      %376 = vmatprep.mubr.f32.mxu0 0.0
      %377 = vmatmul.mubr.f32.gmra.mrb[0].mxu0 %v304
      %v378 = vpop.f32.mrb[0].mxu0
      %v379 = vadd.f32 0.0, %v378
      %v380 = vpop.f32.mrb[0].mxu0
      %v381 = vadd.f32 0.0, %v380
      %382 = vdwg.mxu0
      %v383 = vsel %vm301, %v275, 0
      %v385 = vsel %vm301, %v276, 0
      %387 = vmatprep.subr.mxu0 %v279
      %388 = vmatpush1.msra.mxu0 %v278
      %389 = vmatprep.subr.mxu0 %v281
      %390 = vmatpush1.msra.mxu0 %v280
      %391 = vmatprep.subr.mxu0 %v283
      %392 = vmatpush1.msra.mxu0 %v282
      %393 = vmatprep.subr.mxu0 %v285
      %394 = vmatpush1.msra.mxu0 %v284
      %395 = vmatprep.subr.mxu0 0.0
      %396 = vmatpush1.msra.mxu0 0.0
      %397 = vmatprep.subr.mxu0 0.0
      %398 = vmatpush1.msra.mxu0 0.0
      %399 = vmatprep.subr.mxu0 0.0
      %400 = vmatpush1.msra.mxu0 0.0
      %401 = vmatprep.subr.mxu0 0.0
      %402 = vmatpush1.msra.mxu0 0.0
      %403 = vmatprep.subr.mxu0 0.0
      %404 = vmatpush1.msra.mxu0 0.0
      %405 = vmatprep.subr.mxu0 0.0
      %406 = vmatpush1.msra.mxu0 0.0
      %407 = vmatprep.subr.mxu0 0.0
      %408 = vmatpush1.msra.mxu0 0.0
      %409 = vmatprep.subr.mxu0 0.0
      %410 = vmatpush1.msra.mxu0 0.0
      %411 = vmatprep.subr.mxu0 0.0
      %412 = vmatpush1.msra.mxu0 0.0
      %413 = vmatprep.subr.mxu0 0.0
      %414 = vmatpush1.msra.mxu0 0.0
      %415 = vmatprep.subr.mxu0 0.0
      %416 = vmatpush1.msra.mxu0 0.0
      %417 = vmatprep.subr.mxu0 0.0
      %418 = vmatpush1.msra.mxu0 0.0
      %419 = vmatprep.subr.mxu0 0.0
      %420 = vmatpush1.msra.mxu0 0.0
      %421 = vmatprep.subr.mxu0 0.0
      %422 = vmatpush1.msra.mxu0 0.0
      %423 = vmatprep.subr.mxu0 0.0
      %424 = vmatpush1.msra.mxu0 0.0
      %425 = vmatprep.subr.mxu0 0.0
      %426 = vmatpush1.msra.mxu0 0.0
      %427 = vmatprep.subr.mxu0 0.0
      %428 = vmatpush1.msra.mxu0 0.0
      %429 = vmatprep.subr.mxu0 0.0
      %430 = vmatpush1.msra.mxu0 0.0
      %431 = vmatprep.subr.mxu0 0.0
      %432 = vmatpush1.msra.mxu0 0.0
      %433 = vmatprep.subr.mxu0 0.0
      %434 = vmatpush1.msra.mxu0 0.0
      %435 = vmatprep.subr.mxu0 0.0
      %436 = vmatpush1.msra.mxu0 0.0
      %437 = vmatprep.subr.mxu0 0.0
      %438 = vmatpush1.msra.mxu0 0.0
      %439 = vmatprep.subr.mxu0 0.0
      %440 = vmatpush1.msra.mxu0 0.0
      %441 = vmatprep.subr.mxu0 0.0
      %442 = vmatpush1.msra.mxu0 0.0
      %443 = vmatprep.subr.mxu0 0.0
      %444 = vmatpush1.msra.mxu0 0.0
      %445 = vmatprep.subr.mxu0 0.0
      %446 = vmatpush1.msra.mxu0 0.0
      %447 = vmatprep.subr.mxu0 0.0
      %448 = vmatpush1.msra.mxu0 0.0
      %449 = vmatprep.subr.mxu0 0.0
      %450 = vmatpush1.msra.mxu0 0.0
      %451 = vmatprep.mubr.f32.mxu0 0.0
      %452 = vmatmul.mubr.f32.gmra.mrb[0].mxu0 %v383
      %v453 = vpop.f32.mrb[0].mxu0
      %v454 = vadd.f32 %v373, %v453
      %v455 = vpop.f32.mrb[0].mxu0
      %v456 = vadd.f32 %v375, %v455
      %457 = vmatprep.mubr.f32.mxu0 0.0
      %458 = vmatmul.mubr.f32.gmra.mrb[0].mxu0 %v385
      %v459 = vpop.f32.mrb[0].mxu0
      %v460 = vadd.f32 %v379, %v459
      %v461 = vpop.f32.mrb[0].mxu0
      %v462 = vadd.f32 %v381, %v461
      %463 = vdwg.mxu0
      %s464 = scalar_lea.vmem %s1, 128
      %v465 = vld [vmem:[%s464] sm:$0xff]
      %v466 = vld [vmem:[%s464 + $0x8] sm:$0xff]
      %v467 = vld [vmem:[%s464 + $0x10] sm:$0xff]
      %v468 = vld [vmem:[%s464 + $0x18] sm:$0xff]
      %v469 = vld [vmem:[%s464 + $0x20] sm:$0xff]
      %v470 = vld [vmem:[%s464 + $0x28] sm:$0xff]
      %v471 = vld [vmem:[%s464 + $0x30] sm:$0xff]
      %v472 = vld [vmem:[%s464 + $0x38] sm:$0xff]
      %vm474 = vcmask 1045504
      %v475 = vrot.slane %v275, 2
      %v476 = vrot.slane %v276, 2
      %v477 = vsel %vm474, %v475, %v476
      %v478 = vrot.slane %v277, 2
      %v479 = vsel %vm474, %v476, %v478
      %v480 = vsel %vm301, %v477, 0
      %v482 = vsel %vm301, %v479, 0
      %484 = vmatprep.subr.mxu0 %v466
      %485 = vmatpush1.msra.mxu0 %v465
      %486 = vmatprep.subr.mxu0 %v468
      %487 = vmatpush1.msra.mxu0 %v467
      %488 = vmatprep.subr.mxu0 %v470
      %489 = vmatpush1.msra.mxu0 %v469
      %490 = vmatprep.subr.mxu0 %v472
      %491 = vmatpush1.msra.mxu0 %v471
      %492 = vmatprep.subr.mxu0 0.0
      %493 = vmatpush1.msra.mxu0 0.0
      %494 = vmatprep.subr.mxu0 0.0
      %495 = vmatpush1.msra.mxu0 0.0
      %496 = vmatprep.subr.mxu0 0.0
      %497 = vmatpush1.msra.mxu0 0.0
      %498 = vmatprep.subr.mxu0 0.0
      %499 = vmatpush1.msra.mxu0 0.0
      %500 = vmatprep.subr.mxu0 0.0
      %501 = vmatpush1.msra.mxu0 0.0
      %502 = vmatprep.subr.mxu0 0.0
      %503 = vmatpush1.msra.mxu0 0.0
      %504 = vmatprep.subr.mxu0 0.0
      %505 = vmatpush1.msra.mxu0 0.0
      %506 = vmatprep.subr.mxu0 0.0
      %507 = vmatpush1.msra.mxu0 0.0
      %508 = vmatprep.subr.mxu0 0.0
      %509 = vmatpush1.msra.mxu0 0.0
      %510 = vmatprep.subr.mxu0 0.0
      %511 = vmatpush1.msra.mxu0 0.0
      %512 = vmatprep.subr.mxu0 0.0
      %513 = vmatpush1.msra.mxu0 0.0
      %514 = vmatprep.subr.mxu0 0.0
      %515 = vmatpush1.msra.mxu0 0.0
      %516 = vmatprep.subr.mxu0 0.0
      %517 = vmatpush1.msra.mxu0 0.0
      %518 = vmatprep.subr.mxu0 0.0
      %519 = vmatpush1.msra.mxu0 0.0
      %520 = vmatprep.subr.mxu0 0.0
      %521 = vmatpush1.msra.mxu0 0.0
      %522 = vmatprep.subr.mxu0 0.0
      %523 = vmatpush1.msra.mxu0 0.0
      %524 = vmatprep.subr.mxu0 0.0
      %525 = vmatpush1.msra.mxu0 0.0
      %526 = vmatprep.subr.mxu0 0.0
      %527 = vmatpush1.msra.mxu0 0.0
      %528 = vmatprep.subr.mxu0 0.0
      %529 = vmatpush1.msra.mxu0 0.0
      %530 = vmatprep.subr.mxu0 0.0
      %531 = vmatpush1.msra.mxu0 0.0
      %532 = vmatprep.subr.mxu0 0.0
      %533 = vmatpush1.msra.mxu0 0.0
      %534 = vmatprep.subr.mxu0 0.0
      %535 = vmatpush1.msra.mxu0 0.0
      %536 = vmatprep.subr.mxu0 0.0
      %537 = vmatpush1.msra.mxu0 0.0
      %538 = vmatprep.subr.mxu0 0.0
      %539 = vmatpush1.msra.mxu0 0.0
      %540 = vmatprep.subr.mxu0 0.0
      %541 = vmatpush1.msra.mxu0 0.0
      %542 = vmatprep.subr.mxu0 0.0
      %543 = vmatpush1.msra.mxu0 0.0
      %544 = vmatprep.subr.mxu0 0.0
      %545 = vmatpush1.msra.mxu0 0.0
      %546 = vmatprep.subr.mxu0 0.0
      %547 = vmatpush1.msra.mxu0 0.0
      %548 = vmatprep.mubr.f32.mxu0 0.0
      %549 = vmatmul.mubr.f32.gmra.mrb[0].mxu0 %v480
      %v550 = vpop.f32.mrb[0].mxu0
      %v551 = vadd.f32 0.0, %v550
      %v552 = vpop.f32.mrb[0].mxu0
      %v553 = vadd.f32 0.0, %v552
      %554 = vmatprep.mubr.f32.mxu0 0.0
      %555 = vmatmul.mubr.f32.gmra.mrb[0].mxu0 %v482
      %v556 = vpop.f32.mrb[0].mxu0
      %v557 = vadd.f32 0.0, %v556
      %v558 = vpop.f32.mrb[0].mxu0
      %v559 = vadd.f32 0.0, %v558
      %560 = vdwg.mxu0
      %v561 = vadd.f32 %v454, %v551
      %v562 = vadd.f32 %v456, %v553
      %v563 = vadd.f32 %v460, %v557
      %v564 = vadd.f32 %v462, %v559
      %s565 = scalar_lea.vmem %s1, 192
      %v566 = vld [vmem:[%s565] sm:$0xff]
      %v567 = vld [vmem:[%s565 + $0x8] sm:$0xff]
      %v568 = vld [vmem:[%s565 + $0x10] sm:$0xff]
      %v569 = vld [vmem:[%s565 + $0x18] sm:$0xff]
      %v570 = vld [vmem:[%s565 + $0x20] sm:$0xff]
      %v571 = vld [vmem:[%s565 + $0x28] sm:$0xff]
      %v572 = vld [vmem:[%s565 + $0x30] sm:$0xff]
      %v573 = vld [vmem:[%s565 + $0x38] sm:$0xff]
      %vm574 = vcmask 1044480
      %v575 = vrot.slane %v275, 3
      %v576 = vrot.slane %v276, 3
      %v577 = vsel %vm574, %v575, %v576
      %v578 = vrot.slane %v277, 3
      %v579 = vsel %vm574, %v576, %v578
      %v580 = vsel %vm301, %v577, 0
      %v582 = vsel %vm301, %v579, 0
      %584 = vmatprep.subr.mxu0 %v567
      %585 = vmatpush1.msra.mxu0 %v566
      %586 = vmatprep.subr.mxu0 %v569
      %587 = vmatpush1.msra.mxu0 %v568
      %588 = vmatprep.subr.mxu0 %v571
      %589 = vmatpush1.msra.mxu0 %v570
      %590 = vmatprep.subr.mxu0 %v573
      %591 = vmatpush1.msra.mxu0 %v572
      %592 = vmatprep.subr.mxu0 0.0
      %593 = vmatpush1.msra.mxu0 0.0
      %594 = vmatprep.subr.mxu0 0.0
      %595 = vmatpush1.msra.mxu0 0.0
      %596 = vmatprep.subr.mxu0 0.0
      %597 = vmatpush1.msra.mxu0 0.0
      %598 = vmatprep.subr.mxu0 0.0
      %599 = vmatpush1.msra.mxu0 0.0
      %600 = vmatprep.subr.mxu0 0.0
      %601 = vmatpush1.msra.mxu0 0.0
      %602 = vmatprep.subr.mxu0 0.0
      %603 = vmatpush1.msra.mxu0 0.0
      %604 = vmatprep.subr.mxu0 0.0
      %605 = vmatpush1.msra.mxu0 0.0
      %606 = vmatprep.subr.mxu0 0.0
      %607 = vmatpush1.msra.mxu0 0.0
      %608 = vmatprep.subr.mxu0 0.0
      %609 = vmatpush1.msra.mxu0 0.0
      %610 = vmatprep.subr.mxu0 0.0
      %611 = vmatpush1.msra.mxu0 0.0
      %612 = vmatprep.subr.mxu0 0.0
      %613 = vmatpush1.msra.mxu0 0.0
      %614 = vmatprep.subr.mxu0 0.0
      %615 = vmatpush1.msra.mxu0 0.0
      %616 = vmatprep.subr.mxu0 0.0
      %617 = vmatpush1.msra.mxu0 0.0
      %618 = vmatprep.subr.mxu0 0.0
      %619 = vmatpush1.msra.mxu0 0.0
      %620 = vmatprep.subr.mxu0 0.0
      %621 = vmatpush1.msra.mxu0 0.0
      %622 = vmatprep.subr.mxu0 0.0
      %623 = vmatpush1.msra.mxu0 0.0
      %624 = vmatprep.subr.mxu0 0.0
      %625 = vmatpush1.msra.mxu0 0.0
      %626 = vmatprep.subr.mxu0 0.0
      %627 = vmatpush1.msra.mxu0 0.0
      %628 = vmatprep.subr.mxu0 0.0
      %629 = vmatpush1.msra.mxu0 0.0
      %630 = vmatprep.subr.mxu0 0.0
      %631 = vmatpush1.msra.mxu0 0.0
      %632 = vmatprep.subr.mxu0 0.0
      %633 = vmatpush1.msra.mxu0 0.0
      %634 = vmatprep.subr.mxu0 0.0
      %635 = vmatpush1.msra.mxu0 0.0
      %636 = vmatprep.subr.mxu0 0.0
      %637 = vmatpush1.msra.mxu0 0.0
      %638 = vmatprep.subr.mxu0 0.0
      %639 = vmatpush1.msra.mxu0 0.0
      %640 = vmatprep.subr.mxu0 0.0
      %641 = vmatpush1.msra.mxu0 0.0
      %642 = vmatprep.subr.mxu0 0.0
      %643 = vmatpush1.msra.mxu0 0.0
      %644 = vmatprep.subr.mxu0 0.0
      %645 = vmatpush1.msra.mxu0 0.0
      %646 = vmatprep.subr.mxu0 0.0
      %647 = vmatpush1.msra.mxu0 0.0
      %648 = vmatprep.mubr.f32.mxu0 0.0
      %649 = vmatmul.mubr.f32.gmra.mrb[0].mxu0 %v580
      %v650 = vpop.f32.mrb[0].mxu0
      %v651 = vadd.f32 0.0, %v650
      %v652 = vpop.f32.mrb[0].mxu0
      %v653 = vadd.f32 0.0, %v652
      %654 = vmatprep.mubr.f32.mxu0 0.0
      %655 = vmatmul.mubr.f32.gmra.mrb[0].mxu0 %v582
      %v656 = vpop.f32.mrb[0].mxu0
      %v657 = vadd.f32 0.0, %v656
      %v658 = vpop.f32.mrb[0].mxu0
      %v659 = vadd.f32 0.0, %v658
      %660 = vdwg.mxu0
      %v661 = vadd.f32 %v561, %v651
      %v662 = vadd.f32 %v562, %v653
      %v663 = vadd.f32 %v563, %v657
      %v664 = vadd.f32 %v564, %v659
      %v665 = vld [vmem:[%s2] sm:$0x3]
      %v667 = vlaneseq
      %v668 = vshrl.u32 %v667, 7
      %v669 = vsub.s32 0, %v668
      %v670 = vrot.slane %v665, %v669
      %v671 = vlaneseq
      %v672 = vshrl.u32 %v671, 7
      %v673 = vsub.s32 1, %v672
      %v674 = vrot.slane %v665, %v673
      %v677 = vadd.f32 %v661, %v670
      %v678 = vadd.f32 %v662, %v674
      %v679 = vadd.f32 %v663, %v670
      %v680 = vadd.f32 %v664, %v674
      %vm681 = vcmp.gt.f32.partialorder %v677, 0.0
      %vm682 = vcmp.gt.f32.partialorder %v678, 0.0
      %vm683 = vcmp.gt.f32.partialorder %v679, 0.0
      %vm684 = vcmp.gt.f32.partialorder %v680, 0.0
      %v685 = vmin.f32 %v677, 0.0
      %v686 = vmin.f32 %v678, 0.0
      %v687 = vmin.f32 %v679, 0.0
      %v688 = vmin.f32 %v680, 0.0
      %v689 = vmul.f32 %v685, 1.442695
      %v690 = vpow.pop %v689
      %v691 = vmul.f32 %v686, 1.442695
      %v692 = vpow.pop %v691
      %v693 = vmul.f32 %v687, 1.442695
      %v694 = vpow.pop %v693
      %v695 = vmul.f32 %v688, 1.442695
      %v696 = vpow.pop %v695
      %v697 = vsub.f32 %v690, 1.0
      %v698 = vsub.f32 %v692, 1.0
      %v699 = vsub.f32 %v694, 1.0
      %v700 = vsub.f32 %v696, 1.0
      %v701 = vmul.f32 %v697, 1.6732632
      %v702 = vmul.f32 %v698, 1.6732632
      %v703 = vmul.f32 %v699, 1.6732632
      %v704 = vmul.f32 %v700, 1.6732632
      %v705 = vsel %vm681, %v677, %v701
      %v706 = vsel %vm682, %v678, %v702
      %v707 = vsel %vm683, %v679, %v703
      %v708 = vsel %vm684, %v680, %v704
      %v709 = vmul.f32 %v705, 1.050701
      %v710 = vmul.f32 %v706, 1.050701
      %v711 = vmul.f32 %v707, 1.050701
      %v712 = vmul.f32 %v708, 1.050701
      %v715 = vrot.slane %v709, 1
      %v716 = vrot.slane %v710, 1
      %v719 = vmax.f32 %v709, %v715
      %v720 = vmax.f32 %v710, %v716
      %v723 = vcombine.low %v719, %v720
      %v725 = vunpack.c.l.s4 1966171168
      %v726 = vunpack.c.0.s8 %v725
      %v727 = vlaneseq
      %v728 = vshrl.u32 %v727, 7
      %v729 = vsub.s32 %v726, %v728
      %v730 = vrot.slane %v723, %v729
      %v732 = vunpack.c.l.s4 1966171168
      %v733 = vunpack.c.0.s8 %v732
      %v734 = vlaneseq
      %v735 = vshrl.u32 %v734, 7
      %v736 = vsub.s32 %v733, %v735
      %v737 = vrot.slane %v730, %v736
      %v739 = vlaneseq
      %vm740 = vcmp.ge.s32.totalorder %v739, 0
      %vm741 = vcmp.lt.s32.totalorder %v739, 240
      %vm742 = vmand %vm740, %vm741
      %743 = vst.msk [vmem:[#allocation2] ss:$8 sm:$0x3] %vm742, %v737
      %744 = vst.msk [vmem:[#allocation2] ss:$8 sm:$0x0] %vm742, %v737
      %v745 = vcombine.high %v737, %v737
      %s747 = scalar_lea.vmem [#allocation2], 1
      %748 = vst.msk [vmem:[%s747] ss:$8 sm:$0x3] %vm742, %v745
      %749 = vst.msk [vmem:[%s747] ss:$8 sm:$0x0] %vm742, %v745
      %v750 = vcombine.high %v719, %v720
      %v752 = vunpack.c.l.s4 1966171168
      %v753 = vunpack.c.0.s8 %v752
      %v754 = vlaneseq
      %v755 = vshrl.u32 %v754, 7
      %v756 = vsub.s32 %v753, %v755
      %v757 = vrot.slane %v750, %v756
      %v759 = vunpack.c.l.s4 1966171168
      %v760 = vunpack.c.0.s8 %v759
      %v761 = vlaneseq
      %v762 = vshrl.u32 %v761, 7
      %v763 = vsub.s32 %v760, %v762
      %v764 = vrot.slane %v757, %v763
      %s766 = scalar_lea.vmem [#allocation2], 2
      %767 = vst.msk [vmem:[%s766] ss:$8 sm:$0x3] %vm742, %v764
      %768 = vst.msk [vmem:[%s766] ss:$8 sm:$0x0] %vm742, %v764
      %v769 = vcombine.high %v764, %v764
      %s771 = scalar_lea.vmem [#allocation2], 3
      %772 = vst.msk [vmem:[%s771] ss:$8 sm:$0x3] %vm742, %v769
      %773 = vst.msk [vmem:[%s771] ss:$8 sm:$0x0] %vm742, %v769
      %v776 = vrot.slane %v711, 1
      %v777 = vrot.slane %v712, 1
      %v780 = vmax.f32 %v711, %v776
      %v781 = vmax.f32 %v712, %v777
      %v784 = vcombine.low %v780, %v781
      %v786 = vunpack.c.l.s4 1966171168
      %v787 = vunpack.c.0.s8 %v786
      %v788 = vlaneseq
      %v789 = vshrl.u32 %v788, 7
      %v790 = vsub.s32 %v787, %v789
      %v791 = vrot.slane %v784, %v790
      %v793 = vunpack.c.l.s4 1966171168
      %v794 = vunpack.c.0.s8 %v793
      %v795 = vlaneseq
      %v796 = vshrl.u32 %v795, 7
      %v797 = vsub.s32 %v794, %v796
      %v798 = vrot.slane %v791, %v797
      %s800 = scalar_lea.vmem [#allocation2], 4
      %801 = vst.msk [vmem:[%s800] ss:$8 sm:$0x3] %vm742, %v798
      %802 = vst.msk [vmem:[%s800] ss:$8 sm:$0x0] %vm742, %v798
      %v803 = vcombine.high %v798, %v798
      %s805 = scalar_lea.vmem [#allocation2], 5
      %806 = vst.msk [vmem:[%s805] ss:$8 sm:$0x3] %vm742, %v803
      %807 = vst.msk [vmem:[%s805] ss:$8 sm:$0x0] %vm742, %v803
      %v808 = vcombine.high %v780, %v781
      %v810 = vunpack.c.l.s4 1966171168
      %v811 = vunpack.c.0.s8 %v810
      %v812 = vlaneseq
      %v813 = vshrl.u32 %v812, 7
      %v814 = vsub.s32 %v811, %v813
      %v815 = vrot.slane %v808, %v814
      %v817 = vunpack.c.l.s4 1966171168
      %v818 = vunpack.c.0.s8 %v817
      %v819 = vlaneseq
      %v820 = vshrl.u32 %v819, 7
      %v821 = vsub.s32 %v818, %v820
      %v822 = vrot.slane %v815, %v821
      %s824 = scalar_lea.vmem [#allocation2], 6
      %825 = vst.msk [vmem:[%s824] ss:$8 sm:$0x3] %vm742, %v822
      %826 = vst.msk [vmem:[%s824] ss:$8 sm:$0x0] %vm742, %v822
      %v827 = vld [vmem:[#allocation2] sm:$0x7f]
      %v828 = vld [vmem:[#allocation2 + $0x8] sm:$0x7f]
      %vm829 = vcmask 916480
      %830 = vst.msk [vmem:[#allocation3] sm:$0xff] %vm829, 0.0
      %vm831 = vcmask 911360
      %832 = vst.msk [vmem:[#allocation3 + $0x8] sm:$0x7] %vm831, 0.0
      %834 = vrot.lane.b32.xlu0 %v827, 112
      %v835 = vpop.permute.xlu0 %834
      %v837 = vmax.f32 %v827, %v835
      %vm838 = vcmask 129024
      %839 = vst.msk [vmem:[#allocation3 + $0x2] sm:$0x7f] %vm838, %v837
      %841 = vrot.lane.b32.xlu0 %v837, 112
      %v842 = vpop.permute.xlu0 %841
      %vm844 = vcmask 260224
      %845 = vst.msk [vmem:[#allocation3 + $0x2] sm:$0x7f] %vm844, %v842
      %846 = vrot.lane.b32.xlu0 %v837, 96
      %v847 = vpop.permute.xlu0 %846
      %vm849 = vcmask 391424
      %850 = vst.msk [vmem:[#allocation3 + $0x2] sm:$0x7f] %vm849, %v847
      %851 = vrot.lane.b32.xlu0 %v837, 80
      %v852 = vpop.permute.xlu0 %851
      %vm854 = vcmask 522624
      %855 = vst.msk [vmem:[#allocation3 + $0x2] sm:$0x7f] %vm854, %v852
      %857 = vrot.lane.b32.xlu0 %v828, 112
      %v858 = vpop.permute.xlu0 %857
      %v860 = vmax.f32 %v828, %v858
      %862 = vrot.lane.b32.xlu0 %v860, 64
      %v863 = vpop.permute.xlu0 %862
      %vm865 = vcmask 653824
      %866 = vst.msk [vmem:[#allocation3 + $0x2] sm:$0x7f] %vm865, %v863
      %867 = vrot.lane.b32.xlu0 %v860, 48
      %v868 = vpop.permute.xlu0 %867
      %vm870 = vcmask 785024
      %871 = vst.msk [vmem:[#allocation3 + $0x2] sm:$0x7f] %vm870, %v868
      %872 = vrot.lane.b32.xlu0 %v860, 32
      %v873 = vpop.permute.xlu0 %872
      %vm875 = vcmask 916224
      %876 = vst.msk [vmem:[#allocation3 + $0x2] sm:$0x7f] %vm875, %v873
      %v877 = vld [vmem:[#allocation3] sm:$0xff]
      %v878 = vld [vmem:[#allocation3 + $0x8] sm:$0x7]
      %v879 = vld [vmem:[%s3] sm:$0xff]
      %v880 = vld [vmem:[%s3 + $0x8] sm:$0xff]
      %v881 = vld [vmem:[%s3 + $0x10] sm:$0xff]
      %v882 = vld [vmem:[%s3 + $0x18] sm:$0xff]
      %v883 = vld [vmem:[%s3 + $0x20] sm:$0xff]
      %v884 = vld [vmem:[%s3 + $0x28] sm:$0xff]
      %v885 = vld [vmem:[%s3 + $0x30] sm:$0xff]
      %v886 = vld [vmem:[%s3 + $0x38] sm:$0xff]
      %v887 = vld [vmem:[%s3 + $0x40] sm:$0xff]
      %v888 = vld [vmem:[%s3 + $0x48] sm:$0xff]
      %v889 = vld [vmem:[%s3 + $0x50] sm:$0xff]
      %v890 = vld [vmem:[%s3 + $0x58] sm:$0xff]
      %v891 = vld [vmem:[%s3 + $0x60] sm:$0xff]
      %v892 = vld [vmem:[%s3 + $0x68] sm:$0xff]
      %v893 = vld [vmem:[%s3 + $0x70] sm:$0xff]
      %v894 = vld [vmem:[%s3 + $0x78] sm:$0xff]
      %v895 = vld [vmem:[%s3 + $0x80] sm:$0xff]
      %v896 = vld [vmem:[%s3 + $0x88] sm:$0xff]
      %v897 = vld [vmem:[%s3 + $0x90] sm:$0xff]
      %v898 = vld [vmem:[%s3 + $0x98] sm:$0xff]
      %v899 = vld [vmem:[%s3 + $0xa0] sm:$0xff]
      %v900 = vld [vmem:[%s3 + $0xa8] sm:$0xff]
      %v901 = vld [vmem:[%s3 + $0xb0] sm:$0xff]
      %v902 = vld [vmem:[%s3 + $0xb8] sm:$0xff]
      %v903 = vld [vmem:[%s3 + $0xc0] sm:$0xff]
      %v904 = vld [vmem:[%s3 + $0xc8] sm:$0xff]
      %v905 = vld [vmem:[%s3 + $0xd0] sm:$0xff]
      %v906 = vld [vmem:[%s3 + $0xd8] sm:$0xff]
      %s907 = scalar_lea.vmem %s3, 224
      %v908 = vld [vmem:[%s907] sm:$0xff]
      %v909 = vld [vmem:[%s907 + $0x8] sm:$0xff]
      %v910 = vld [vmem:[%s907 + $0x10] sm:$0xff]
      %v911 = vld [vmem:[%s907 + $0x18] sm:$0xff]
      %v912 = vld [vmem:[%s907 + $0x20] sm:$0xff]
      %v913 = vld [vmem:[%s907 + $0x28] sm:$0xff]
      %v914 = vld [vmem:[%s907 + $0x30] sm:$0xff]
      %v915 = vld [vmem:[%s907 + $0x38] sm:$0xff]
      %v916 = vld [vmem:[%s907 + $0x40] sm:$0xff]
      %v917 = vld [vmem:[%s907 + $0x48] sm:$0xff]
      %v918 = vld [vmem:[%s907 + $0x50] sm:$0xff]
      %v919 = vld [vmem:[%s907 + $0x58] sm:$0xff]
      %v920 = vld [vmem:[%s907 + $0x60] sm:$0xff]
      %v921 = vld [vmem:[%s907 + $0x68] sm:$0xff]
      %v922 = vld [vmem:[%s907 + $0x70] sm:$0xff]
      %v923 = vld [vmem:[%s907 + $0x78] sm:$0xff]
      %v924 = vld [vmem:[%s907 + $0x80] sm:$0xff]
      %v925 = vld [vmem:[%s907 + $0x88] sm:$0xff]
      %v926 = vld [vmem:[%s907 + $0x90] sm:$0xff]
      %v927 = vld [vmem:[%s907 + $0x98] sm:$0xff]
      %v928 = vld [vmem:[%s907 + $0xa0] sm:$0xff]
      %v929 = vld [vmem:[%s907 + $0xa8] sm:$0xff]
      %v930 = vld [vmem:[%s907 + $0xb0] sm:$0xff]
      %v931 = vld [vmem:[%s907 + $0xb8] sm:$0xff]
      %v932 = vld [vmem:[%s907 + $0xc0] sm:$0xff]
      %v933 = vld [vmem:[%s907 + $0xc8] sm:$0xff]
      %v934 = vld [vmem:[%s907 + $0xd0] sm:$0xff]
      %v935 = vld [vmem:[%s907 + $0xd8] sm:$0xff]
      %v937 = vrot.slane %v877, 1
      %v938 = vsel %vm829, %v937, 0
      %940 = vmatprep.subr.mxu0 %v909
      %941 = vmatpush1.msra.mxu0 %v908
      %942 = vmatprep.subr.mxu0 %v911
      %943 = vmatpush1.msra.mxu0 %v910
      %944 = vmatprep.subr.mxu0 %v913
      %945 = vmatpush1.msra.mxu0 %v912
      %946 = vmatprep.subr.mxu0 %v915
      %947 = vmatpush1.msra.mxu0 %v914
      %948 = vmatprep.subr.mxu0 %v917
      %949 = vmatpush1.msra.mxu0 %v916
      %950 = vmatprep.subr.mxu0 %v919
      %951 = vmatpush1.msra.mxu0 %v918
      %952 = vmatprep.subr.mxu0 %v921
      %953 = vmatpush1.msra.mxu0 %v920
      %954 = vmatprep.subr.mxu0 %v923
      %955 = vmatpush1.msra.mxu0 %v922
      %956 = vmatprep.subr.mxu0 %v925
      %957 = vmatpush1.msra.mxu0 %v924
      %958 = vmatprep.subr.mxu0 %v927
      %959 = vmatpush1.msra.mxu0 %v926
      %960 = vmatprep.subr.mxu0 %v929
      %961 = vmatpush1.msra.mxu0 %v928
      %962 = vmatprep.subr.mxu0 %v931
      %963 = vmatpush1.msra.mxu0 %v930
      %964 = vmatprep.subr.mxu0 %v933
      %965 = vmatpush1.msra.mxu0 %v932
      %966 = vmatprep.subr.mxu0 %v935
      %967 = vmatpush1.msra.mxu0 %v934
      %968 = vmatprep.subr.mxu0 0.0
      %969 = vmatpush1.msra.mxu0 0.0
      %970 = vmatprep.subr.mxu0 0.0
      %971 = vmatpush1.msra.mxu0 0.0
      %972 = vmatprep.subr.mxu0 0.0
      %973 = vmatpush1.msra.mxu0 0.0
      %974 = vmatprep.subr.mxu0 0.0
      %975 = vmatpush1.msra.mxu0 0.0
      %976 = vmatprep.subr.mxu0 0.0
      %977 = vmatpush1.msra.mxu0 0.0
      %978 = vmatprep.subr.mxu0 0.0
      %979 = vmatpush1.msra.mxu0 0.0
      %980 = vmatprep.subr.mxu0 0.0
      %981 = vmatpush1.msra.mxu0 0.0
      %982 = vmatprep.subr.mxu0 0.0
      %983 = vmatpush1.msra.mxu0 0.0
      %984 = vmatprep.subr.mxu0 0.0
      %985 = vmatpush1.msra.mxu0 0.0
      %986 = vmatprep.subr.mxu0 0.0
      %987 = vmatpush1.msra.mxu0 0.0
      %988 = vmatprep.subr.mxu0 0.0
      %989 = vmatpush1.msra.mxu0 0.0
      %990 = vmatprep.subr.mxu0 0.0
      %991 = vmatpush1.msra.mxu0 0.0
      %992 = vmatprep.subr.mxu0 0.0
      %993 = vmatpush1.msra.mxu0 0.0
      %994 = vmatprep.subr.mxu0 0.0
      %995 = vmatpush1.msra.mxu0 0.0
      %996 = vmatprep.subr.mxu0 0.0
      %997 = vmatpush1.msra.mxu0 0.0
      %998 = vmatprep.subr.mxu0 0.0
      %999 = vmatpush1.msra.mxu0 0.0
      %1000 = vmatprep.subr.mxu0 0.0
      %1001 = vmatpush1.msra.mxu0 0.0
      %1002 = vmatprep.subr.mxu0 0.0
      %1003 = vmatpush1.msra.mxu0 0.0
      %1004 = vmatprep.mubr.f32.mxu0 0.0
      %1005 = vmatmul.mubr.f32.gmra.mrb[0].mxu0 %v938
      %v1006 = vpop.f32.mrb[0].mxu0
      %v1007 = vadd.f32 0.0, %v1006
      %v1008 = vpop.f32.mrb[0].mxu0
      %v1009 = vadd.f32 0.0, %v1008
      %1010 = vdwg.mxu0
      %v1011 = vsel %vm829, %v877, 0
      %1013 = vmatprep.subr.mxu0 %v880
      %1014 = vmatpush1.msra.mxu0 %v879
      %1015 = vmatprep.subr.mxu0 %v882
      %1016 = vmatpush1.msra.mxu0 %v881
      %1017 = vmatprep.subr.mxu0 %v884
      %1018 = vmatpush1.msra.mxu0 %v883
      %1019 = vmatprep.subr.mxu0 %v886
      %1020 = vmatpush1.msra.mxu0 %v885
      %1021 = vmatprep.subr.mxu0 %v888
      %1022 = vmatpush1.msra.mxu0 %v887
      %1023 = vmatprep.subr.mxu0 %v890
      %1024 = vmatpush1.msra.mxu0 %v889
      %1025 = vmatprep.subr.mxu0 %v892
      %1026 = vmatpush1.msra.mxu0 %v891
      %1027 = vmatprep.subr.mxu0 %v894
      %1028 = vmatpush1.msra.mxu0 %v893
      %1029 = vmatprep.subr.mxu0 %v896
      %1030 = vmatpush1.msra.mxu0 %v895
      %1031 = vmatprep.subr.mxu0 %v898
      %1032 = vmatpush1.msra.mxu0 %v897
      %1033 = vmatprep.subr.mxu0 %v900
      %1034 = vmatpush1.msra.mxu0 %v899
      %1035 = vmatprep.subr.mxu0 %v902
      %1036 = vmatpush1.msra.mxu0 %v901
      %1037 = vmatprep.subr.mxu0 %v904
      %1038 = vmatpush1.msra.mxu0 %v903
      %1039 = vmatprep.subr.mxu0 %v906
      %1040 = vmatpush1.msra.mxu0 %v905
      %1041 = vmatprep.subr.mxu0 0.0
      %1042 = vmatpush1.msra.mxu0 0.0
      %1043 = vmatprep.subr.mxu0 0.0
      %1044 = vmatpush1.msra.mxu0 0.0
      %1045 = vmatprep.subr.mxu0 0.0
      %1046 = vmatpush1.msra.mxu0 0.0
      %1047 = vmatprep.subr.mxu0 0.0
      %1048 = vmatpush1.msra.mxu0 0.0
      %1049 = vmatprep.subr.mxu0 0.0
      %1050 = vmatpush1.msra.mxu0 0.0
      %1051 = vmatprep.subr.mxu0 0.0
      %1052 = vmatpush1.msra.mxu0 0.0
      %1053 = vmatprep.subr.mxu0 0.0
      %1054 = vmatpush1.msra.mxu0 0.0
      %1055 = vmatprep.subr.mxu0 0.0
      %1056 = vmatpush1.msra.mxu0 0.0
      %1057 = vmatprep.subr.mxu0 0.0
      %1058 = vmatpush1.msra.mxu0 0.0
      %1059 = vmatprep.subr.mxu0 0.0
      %1060 = vmatpush1.msra.mxu0 0.0
      %1061 = vmatprep.subr.mxu0 0.0
      %1062 = vmatpush1.msra.mxu0 0.0
      %1063 = vmatprep.subr.mxu0 0.0
      %1064 = vmatpush1.msra.mxu0 0.0
      %1065 = vmatprep.subr.mxu0 0.0
      %1066 = vmatpush1.msra.mxu0 0.0
      %1067 = vmatprep.subr.mxu0 0.0
      %1068 = vmatpush1.msra.mxu0 0.0
      %1069 = vmatprep.subr.mxu0 0.0
      %1070 = vmatpush1.msra.mxu0 0.0
      %1071 = vmatprep.subr.mxu0 0.0
      %1072 = vmatpush1.msra.mxu0 0.0
      %1073 = vmatprep.subr.mxu0 0.0
      %1074 = vmatpush1.msra.mxu0 0.0
      %1075 = vmatprep.subr.mxu0 0.0
      %1076 = vmatpush1.msra.mxu0 0.0
      %1077 = vmatprep.mubr.f32.mxu0 0.0
      %1078 = vmatmul.mubr.f32.gmra.mrb[0].mxu0 %v1011
      %v1079 = vpop.f32.mrb[0].mxu0
      %v1080 = vadd.f32 %v1007, %v1079
      %v1081 = vpop.f32.mrb[0].mxu0
      %v1082 = vadd.f32 %v1009, %v1081
      %1083 = vdwg.mxu0
      %s1084 = scalar_lea.vmem %s3, 448
      %v1085 = vld [vmem:[%s1084] sm:$0xff]
      %v1086 = vld [vmem:[%s1084 + $0x8] sm:$0xff]
      %v1087 = vld [vmem:[%s1084 + $0x10] sm:$0xff]
      %v1088 = vld [vmem:[%s1084 + $0x18] sm:$0xff]
      %v1089 = vld [vmem:[%s1084 + $0x20] sm:$0xff]
      %v1090 = vld [vmem:[%s1084 + $0x28] sm:$0xff]
      %v1091 = vld [vmem:[%s1084 + $0x30] sm:$0xff]
      %v1092 = vld [vmem:[%s1084 + $0x38] sm:$0xff]
      %v1093 = vld [vmem:[%s1084 + $0x40] sm:$0xff]
      %v1094 = vld [vmem:[%s1084 + $0x48] sm:$0xff]
      %v1095 = vld [vmem:[%s1084 + $0x50] sm:$0xff]
      %v1096 = vld [vmem:[%s1084 + $0x58] sm:$0xff]
      %v1097 = vld [vmem:[%s1084 + $0x60] sm:$0xff]
      %v1098 = vld [vmem:[%s1084 + $0x68] sm:$0xff]
      %v1099 = vld [vmem:[%s1084 + $0x70] sm:$0xff]
      %v1100 = vld [vmem:[%s1084 + $0x78] sm:$0xff]
      %v1101 = vld [vmem:[%s1084 + $0x80] sm:$0xff]
      %v1102 = vld [vmem:[%s1084 + $0x88] sm:$0xff]
      %v1103 = vld [vmem:[%s1084 + $0x90] sm:$0xff]
      %v1104 = vld [vmem:[%s1084 + $0x98] sm:$0xff]
      %v1105 = vld [vmem:[%s1084 + $0xa0] sm:$0xff]
      %v1106 = vld [vmem:[%s1084 + $0xa8] sm:$0xff]
      %v1107 = vld [vmem:[%s1084 + $0xb0] sm:$0xff]
      %v1108 = vld [vmem:[%s1084 + $0xb8] sm:$0xff]
      %v1109 = vld [vmem:[%s1084 + $0xc0] sm:$0xff]
      %v1110 = vld [vmem:[%s1084 + $0xc8] sm:$0xff]
      %v1111 = vld [vmem:[%s1084 + $0xd0] sm:$0xff]
      %v1112 = vld [vmem:[%s1084 + $0xd8] sm:$0xff]
      %v1114 = vrot.slane %v877, 2
      %v1115 = vrot.slane %v878, 2
      %v1116 = vsel %vm474, %v1114, %v1115
      %v1117 = vsel %vm829, %v1116, 0
      %1119 = vmatprep.subr.mxu0 %v1086
      %1120 = vmatpush1.msra.mxu0 %v1085
      %1121 = vmatprep.subr.mxu0 %v1088
      %1122 = vmatpush1.msra.mxu0 %v1087
      %1123 = vmatprep.subr.mxu0 %v1090
      %1124 = vmatpush1.msra.mxu0 %v1089
      %1125 = vmatprep.subr.mxu0 %v1092
      %1126 = vmatpush1.msra.mxu0 %v1091
      %1127 = vmatprep.subr.mxu0 %v1094
      %1128 = vmatpush1.msra.mxu0 %v1093
      %1129 = vmatprep.subr.mxu0 %v1096
      %1130 = vmatpush1.msra.mxu0 %v1095
      %1131 = vmatprep.subr.mxu0 %v1098
      %1132 = vmatpush1.msra.mxu0 %v1097
      %1133 = vmatprep.subr.mxu0 %v1100
      %1134 = vmatpush1.msra.mxu0 %v1099
      %1135 = vmatprep.subr.mxu0 %v1102
      %1136 = vmatpush1.msra.mxu0 %v1101
      %1137 = vmatprep.subr.mxu0 %v1104
      %1138 = vmatpush1.msra.mxu0 %v1103
      %1139 = vmatprep.subr.mxu0 %v1106
      %1140 = vmatpush1.msra.mxu0 %v1105
      %1141 = vmatprep.subr.mxu0 %v1108
      %1142 = vmatpush1.msra.mxu0 %v1107
      %1143 = vmatprep.subr.mxu0 %v1110
      %1144 = vmatpush1.msra.mxu0 %v1109
      %1145 = vmatprep.subr.mxu0 %v1112
      %1146 = vmatpush1.msra.mxu0 %v1111
      %1147 = vmatprep.subr.mxu0 0.0
      %1148 = vmatpush1.msra.mxu0 0.0
      %1149 = vmatprep.subr.mxu0 0.0
      %1150 = vmatpush1.msra.mxu0 0.0
      %1151 = vmatprep.subr.mxu0 0.0
      %1152 = vmatpush1.msra.mxu0 0.0
      %1153 = vmatprep.subr.mxu0 0.0
      %1154 = vmatpush1.msra.mxu0 0.0
      %1155 = vmatprep.subr.mxu0 0.0
      %1156 = vmatpush1.msra.mxu0 0.0
      %1157 = vmatprep.subr.mxu0 0.0
      %1158 = vmatpush1.msra.mxu0 0.0
      %1159 = vmatprep.subr.mxu0 0.0
      %1160 = vmatpush1.msra.mxu0 0.0
      %1161 = vmatprep.subr.mxu0 0.0
      %1162 = vmatpush1.msra.mxu0 0.0
      %1163 = vmatprep.subr.mxu0 0.0
      %1164 = vmatpush1.msra.mxu0 0.0
      %1165 = vmatprep.subr.mxu0 0.0
      %1166 = vmatpush1.msra.mxu0 0.0
      %1167 = vmatprep.subr.mxu0 0.0
      %1168 = vmatpush1.msra.mxu0 0.0
      %1169 = vmatprep.subr.mxu0 0.0
      %1170 = vmatpush1.msra.mxu0 0.0
      %1171 = vmatprep.subr.mxu0 0.0
      %1172 = vmatpush1.msra.mxu0 0.0
      %1173 = vmatprep.subr.mxu0 0.0
      %1174 = vmatpush1.msra.mxu0 0.0
      %1175 = vmatprep.subr.mxu0 0.0
      %1176 = vmatpush1.msra.mxu0 0.0
      %1177 = vmatprep.subr.mxu0 0.0
      %1178 = vmatpush1.msra.mxu0 0.0
      %1179 = vmatprep.subr.mxu0 0.0
      %1180 = vmatpush1.msra.mxu0 0.0
      %1181 = vmatprep.subr.mxu0 0.0
      %1182 = vmatpush1.msra.mxu0 0.0
      %1183 = vmatprep.mubr.f32.mxu0 0.0
      %1184 = vmatmul.mubr.f32.gmra.mrb[0].mxu0 %v1117
      %v1185 = vpop.f32.mrb[0].mxu0
      %v1186 = vadd.f32 0.0, %v1185
      %v1187 = vpop.f32.mrb[0].mxu0
      %v1188 = vadd.f32 0.0, %v1187
      %1189 = vdwg.mxu0
      %v1190 = vadd.f32 %v1080, %v1186
      %v1191 = vadd.f32 %v1082, %v1188
      %s1192 = scalar_lea.vmem %s3, 672
      %v1193 = vld [vmem:[%s1192] sm:$0xff]
      %v1194 = vld [vmem:[%s1192 + $0x8] sm:$0xff]
      %v1195 = vld [vmem:[%s1192 + $0x10] sm:$0xff]
      %v1196 = vld [vmem:[%s1192 + $0x18] sm:$0xff]
      %v1197 = vld [vmem:[%s1192 + $0x20] sm:$0xff]
      %v1198 = vld [vmem:[%s1192 + $0x28] sm:$0xff]
      %v1199 = vld [vmem:[%s1192 + $0x30] sm:$0xff]
      %v1200 = vld [vmem:[%s1192 + $0x38] sm:$0xff]
      %v1201 = vld [vmem:[%s1192 + $0x40] sm:$0xff]
      %v1202 = vld [vmem:[%s1192 + $0x48] sm:$0xff]
      %v1203 = vld [vmem:[%s1192 + $0x50] sm:$0xff]
      %v1204 = vld [vmem:[%s1192 + $0x58] sm:$0xff]
      %v1205 = vld [vmem:[%s1192 + $0x60] sm:$0xff]
      %v1206 = vld [vmem:[%s1192 + $0x68] sm:$0xff]
      %v1207 = vld [vmem:[%s1192 + $0x70] sm:$0xff]
      %v1208 = vld [vmem:[%s1192 + $0x78] sm:$0xff]
      %v1209 = vld [vmem:[%s1192 + $0x80] sm:$0xff]
      %v1210 = vld [vmem:[%s1192 + $0x88] sm:$0xff]
      %v1211 = vld [vmem:[%s1192 + $0x90] sm:$0xff]
      %v1212 = vld [vmem:[%s1192 + $0x98] sm:$0xff]
      %v1213 = vld [vmem:[%s1192 + $0xa0] sm:$0xff]
      %v1214 = vld [vmem:[%s1192 + $0xa8] sm:$0xff]
      %v1215 = vld [vmem:[%s1192 + $0xb0] sm:$0xff]
      %v1216 = vld [vmem:[%s1192 + $0xb8] sm:$0xff]
      %v1217 = vld [vmem:[%s1192 + $0xc0] sm:$0xff]
      %v1218 = vld [vmem:[%s1192 + $0xc8] sm:$0xff]
      %v1219 = vld [vmem:[%s1192 + $0xd0] sm:$0xff]
      %v1220 = vld [vmem:[%s1192 + $0xd8] sm:$0xff]
      %v1221 = vrot.slane %v877, 3
      %v1222 = vrot.slane %v878, 3
      %v1223 = vsel %vm574, %v1221, %v1222
      %v1224 = vsel %vm829, %v1223, 0
      %1226 = vmatprep.subr.mxu0 %v1194
      %1227 = vmatpush1.msra.mxu0 %v1193
      %1228 = vmatprep.subr.mxu0 %v1196
      %1229 = vmatpush1.msra.mxu0 %v1195
      %1230 = vmatprep.subr.mxu0 %v1198
      %1231 = vmatpush1.msra.mxu0 %v1197
      %1232 = vmatprep.subr.mxu0 %v1200
      %1233 = vmatpush1.msra.mxu0 %v1199
      %1234 = vmatprep.subr.mxu0 %v1202
      %1235 = vmatpush1.msra.mxu0 %v1201
      %1236 = vmatprep.subr.mxu0 %v1204
      %1237 = vmatpush1.msra.mxu0 %v1203
      %1238 = vmatprep.subr.mxu0 %v1206
      %1239 = vmatpush1.msra.mxu0 %v1205
      %1240 = vmatprep.subr.mxu0 %v1208
      %1241 = vmatpush1.msra.mxu0 %v1207
      %1242 = vmatprep.subr.mxu0 %v1210
      %1243 = vmatpush1.msra.mxu0 %v1209
      %1244 = vmatprep.subr.mxu0 %v1212
      %1245 = vmatpush1.msra.mxu0 %v1211
      %1246 = vmatprep.subr.mxu0 %v1214
      %1247 = vmatpush1.msra.mxu0 %v1213
      %1248 = vmatprep.subr.mxu0 %v1216
      %1249 = vmatpush1.msra.mxu0 %v1215
      %1250 = vmatprep.subr.mxu0 %v1218
      %1251 = vmatpush1.msra.mxu0 %v1217
      %1252 = vmatprep.subr.mxu0 %v1220
      %1253 = vmatpush1.msra.mxu0 %v1219
      %1254 = vmatprep.subr.mxu0 0.0
      %1255 = vmatpush1.msra.mxu0 0.0
      %1256 = vmatprep.subr.mxu0 0.0
      %1257 = vmatpush1.msra.mxu0 0.0
      %1258 = vmatprep.subr.mxu0 0.0
      %1259 = vmatpush1.msra.mxu0 0.0
      %1260 = vmatprep.subr.mxu0 0.0
      %1261 = vmatpush1.msra.mxu0 0.0
      %1262 = vmatprep.subr.mxu0 0.0
      %1263 = vmatpush1.msra.mxu0 0.0
      %1264 = vmatprep.subr.mxu0 0.0
      %1265 = vmatpush1.msra.mxu0 0.0
      %1266 = vmatprep.subr.mxu0 0.0
      %1267 = vmatpush1.msra.mxu0 0.0
      %1268 = vmatprep.subr.mxu0 0.0
      %1269 = vmatpush1.msra.mxu0 0.0
      %1270 = vmatprep.subr.mxu0 0.0
      %1271 = vmatpush1.msra.mxu0 0.0
      %1272 = vmatprep.subr.mxu0 0.0
      %1273 = vmatpush1.msra.mxu0 0.0
      %1274 = vmatprep.subr.mxu0 0.0
      %1275 = vmatpush1.msra.mxu0 0.0
      %1276 = vmatprep.subr.mxu0 0.0
      %1277 = vmatpush1.msra.mxu0 0.0
      %1278 = vmatprep.subr.mxu0 0.0
      %1279 = vmatpush1.msra.mxu0 0.0
      %1280 = vmatprep.subr.mxu0 0.0
      %1281 = vmatpush1.msra.mxu0 0.0
      %1282 = vmatprep.subr.mxu0 0.0
      %1283 = vmatpush1.msra.mxu0 0.0
      %1284 = vmatprep.subr.mxu0 0.0
      %1285 = vmatpush1.msra.mxu0 0.0
      %1286 = vmatprep.subr.mxu0 0.0
      %1287 = vmatpush1.msra.mxu0 0.0
      %1288 = vmatprep.subr.mxu0 0.0
      %1289 = vmatpush1.msra.mxu0 0.0
      %1290 = vmatprep.mubr.f32.mxu0 0.0
      %1291 = vmatmul.mubr.f32.gmra.mrb[0].mxu0 %v1224
      %v1292 = vpop.f32.mrb[0].mxu0
      %v1293 = vadd.f32 0.0, %v1292
      %v1294 = vpop.f32.mrb[0].mxu0
      %v1295 = vadd.f32 0.0, %v1294
      %1296 = vdwg.mxu0
      %v1297 = vadd.f32 %v1190, %v1293
      %v1298 = vadd.f32 %v1191, %v1295
      %s1299 = scalar_lea.vmem %s3, 896
      %v1300 = vld [vmem:[%s1299] sm:$0xff]
      %v1301 = vld [vmem:[%s1299 + $0x8] sm:$0xff]
      %v1302 = vld [vmem:[%s1299 + $0x10] sm:$0xff]
      %v1303 = vld [vmem:[%s1299 + $0x18] sm:$0xff]
      %v1304 = vld [vmem:[%s1299 + $0x20] sm:$0xff]
      %v1305 = vld [vmem:[%s1299 + $0x28] sm:$0xff]
      %v1306 = vld [vmem:[%s1299 + $0x30] sm:$0xff]
      %v1307 = vld [vmem:[%s1299 + $0x38] sm:$0xff]
      %v1308 = vld [vmem:[%s1299 + $0x40] sm:$0xff]
      %v1309 = vld [vmem:[%s1299 + $0x48] sm:$0xff]
      %v1310 = vld [vmem:[%s1299 + $0x50] sm:$0xff]
      %v1311 = vld [vmem:[%s1299 + $0x58] sm:$0xff]
      %v1312 = vld [vmem:[%s1299 + $0x60] sm:$0xff]
      %v1313 = vld [vmem:[%s1299 + $0x68] sm:$0xff]
      %v1314 = vld [vmem:[%s1299 + $0x70] sm:$0xff]
      %v1315 = vld [vmem:[%s1299 + $0x78] sm:$0xff]
      %v1316 = vld [vmem:[%s1299 + $0x80] sm:$0xff]
      %v1317 = vld [vmem:[%s1299 + $0x88] sm:$0xff]
      %v1318 = vld [vmem:[%s1299 + $0x90] sm:$0xff]
      %v1319 = vld [vmem:[%s1299 + $0x98] sm:$0xff]
      %v1320 = vld [vmem:[%s1299 + $0xa0] sm:$0xff]
      %v1321 = vld [vmem:[%s1299 + $0xa8] sm:$0xff]
      %v1322 = vld [vmem:[%s1299 + $0xb0] sm:$0xff]
      %v1323 = vld [vmem:[%s1299 + $0xb8] sm:$0xff]
      %v1324 = vld [vmem:[%s1299 + $0xc0] sm:$0xff]
      %v1325 = vld [vmem:[%s1299 + $0xc8] sm:$0xff]
      %v1326 = vld [vmem:[%s1299 + $0xd0] sm:$0xff]
      %v1327 = vld [vmem:[%s1299 + $0xd8] sm:$0xff]
      %vm1328 = vcmask 1043456
      %v1329 = vrot.slane %v877, 4
      %v1330 = vrot.slane %v878, 4
      %v1331 = vsel %vm1328, %v1329, %v1330
      %v1332 = vsel %vm829, %v1331, 0
      %1334 = vmatprep.subr.mxu0 %v1301
      %1335 = vmatpush1.msra.mxu0 %v1300
      %1336 = vmatprep.subr.mxu0 %v1303
      %1337 = vmatpush1.msra.mxu0 %v1302
      %1338 = vmatprep.subr.mxu0 %v1305
      %1339 = vmatpush1.msra.mxu0 %v1304
      %1340 = vmatprep.subr.mxu0 %v1307
      %1341 = vmatpush1.msra.mxu0 %v1306
      %1342 = vmatprep.subr.mxu0 %v1309
      %1343 = vmatpush1.msra.mxu0 %v1308
      %1344 = vmatprep.subr.mxu0 %v1311
      %1345 = vmatpush1.msra.mxu0 %v1310
      %1346 = vmatprep.subr.mxu0 %v1313
      %1347 = vmatpush1.msra.mxu0 %v1312
      %1348 = vmatprep.subr.mxu0 %v1315
      %1349 = vmatpush1.msra.mxu0 %v1314
      %1350 = vmatprep.subr.mxu0 %v1317
      %1351 = vmatpush1.msra.mxu0 %v1316
      %1352 = vmatprep.subr.mxu0 %v1319
      %1353 = vmatpush1.msra.mxu0 %v1318
      %1354 = vmatprep.subr.mxu0 %v1321
      %1355 = vmatpush1.msra.mxu0 %v1320
      %1356 = vmatprep.subr.mxu0 %v1323
      %1357 = vmatpush1.msra.mxu0 %v1322
      %1358 = vmatprep.subr.mxu0 %v1325
      %1359 = vmatpush1.msra.mxu0 %v1324
      %1360 = vmatprep.subr.mxu0 %v1327
      %1361 = vmatpush1.msra.mxu0 %v1326
      %1362 = vmatprep.subr.mxu0 0.0
      %1363 = vmatpush1.msra.mxu0 0.0
      %1364 = vmatprep.subr.mxu0 0.0
      %1365 = vmatpush1.msra.mxu0 0.0
      %1366 = vmatprep.subr.mxu0 0.0
      %1367 = vmatpush1.msra.mxu0 0.0
      %1368 = vmatprep.subr.mxu0 0.0
      %1369 = vmatpush1.msra.mxu0 0.0
      %1370 = vmatprep.subr.mxu0 0.0
      %1371 = vmatpush1.msra.mxu0 0.0
      %1372 = vmatprep.subr.mxu0 0.0
      %1373 = vmatpush1.msra.mxu0 0.0
      %1374 = vmatprep.subr.mxu0 0.0
      %1375 = vmatpush1.msra.mxu0 0.0
      %1376 = vmatprep.subr.mxu0 0.0
      %1377 = vmatpush1.msra.mxu0 0.0
      %1378 = vmatprep.subr.mxu0 0.0
      %1379 = vmatpush1.msra.mxu0 0.0
      %1380 = vmatprep.subr.mxu0 0.0
      %1381 = vmatpush1.msra.mxu0 0.0
      %1382 = vmatprep.subr.mxu0 0.0
      %1383 = vmatpush1.msra.mxu0 0.0
      %1384 = vmatprep.subr.mxu0 0.0
      %1385 = vmatpush1.msra.mxu0 0.0
      %1386 = vmatprep.subr.mxu0 0.0
      %1387 = vmatpush1.msra.mxu0 0.0
      %1388 = vmatprep.subr.mxu0 0.0
      %1389 = vmatpush1.msra.mxu0 0.0
      %1390 = vmatprep.subr.mxu0 0.0
      %1391 = vmatpush1.msra.mxu0 0.0
      %1392 = vmatprep.subr.mxu0 0.0
      %1393 = vmatpush1.msra.mxu0 0.0
      %1394 = vmatprep.subr.mxu0 0.0
      %1395 = vmatpush1.msra.mxu0 0.0
      %1396 = vmatprep.subr.mxu0 0.0
      %1397 = vmatpush1.msra.mxu0 0.0
      %1398 = vmatprep.mubr.f32.mxu0 0.0
      %1399 = vmatmul.mubr.f32.gmra.mrb[0].mxu0 %v1332
      %v1400 = vpop.f32.mrb[0].mxu0
      %v1401 = vadd.f32 0.0, %v1400
      %v1402 = vpop.f32.mrb[0].mxu0
      %v1403 = vadd.f32 0.0, %v1402
      %1404 = vdwg.mxu0
      %v1405 = vadd.f32 %v1297, %v1401
      %v1406 = vadd.f32 %v1298, %v1403
      %v1407 = vld [vmem:[%s4] sm:$0x3]
      %v1409 = vlaneseq
      %v1410 = vshrl.u32 %v1409, 7
      %v1411 = vsub.s32 0, %v1410
      %v1412 = vrot.slane %v1407, %v1411
      %v1413 = vlaneseq
      %v1414 = vshrl.u32 %v1413, 7
      %v1415 = vsub.s32 1, %v1414
      %v1416 = vrot.slane %v1407, %v1415
      %v1419 = vadd.f32 %v1405, %v1412
      %v1420 = vadd.f32 %v1406, %v1416
      %vm1421 = vcmp.gt.f32.partialorder %v1419, 0.0
      %vm1422 = vcmp.gt.f32.partialorder %v1420, 0.0
      %v1423 = vmin.f32 %v1419, 0.0
      %v1424 = vmin.f32 %v1420, 0.0
      %v1425 = vmul.f32 %v1423, 1.442695
      %v1426 = vpow.pop %v1425
      %v1427 = vmul.f32 %v1424, 1.442695
      %v1428 = vpow.pop %v1427
      %v1429 = vsub.f32 %v1426, 1.0
      %v1430 = vsub.f32 %v1428, 1.0
      %v1431 = vmul.f32 %v1429, 1.6732632
      %v1432 = vmul.f32 %v1430, 1.6732632
      %v1433 = vsel %vm1421, %v1419, %v1431
      %v1434 = vsel %vm1422, %v1420, %v1432
      %v1435 = vmul.f32 %v1433, 1.050701
      %v1436 = vmul.f32 %v1434, 1.050701
      %v1437 = vld [vmem:[%s6] sm:$0x1]
      %v1440 = vrot.slane %v1435, 1
      %v1441 = vrot.slane %v1436, 1
      %v1444 = vmax.f32 %v1435, %v1440
      %v1445 = vmax.f32 %v1436, %v1441
      %1447 = vrot.lane.b32.xlu0 %v1444, 96
      %v1448 = vpop.permute.xlu0 %1447
      %v1450 = vmax.f32 %v1444, %v1448
      %v1451 = vld [vmem:[%s5] sm:$0xff]
      %v1452 = vld [vmem:[%s5 + $0x8] sm:$0xff]
      %v1453 = vld [vmem:[%s5 + $0x10] sm:$0xff]
      %v1454 = vld [vmem:[%s5 + $0x18] sm:$0xff]
      %v1456 = vsel %vm301, %v1450, 0
      %1458 = vmatprep.subr.mxu0 0.0
      %1459 = vmatpush1.msra.mxu0 %v1451
      %1460 = vmatprep.subr.mxu0 0.0
      %1461 = vmatpush1.msra.mxu0 %v1452
      %1462 = vmatprep.subr.mxu0 0.0
      %1463 = vmatpush1.msra.mxu0 %v1453
      %1464 = vmatprep.subr.mxu0 0.0
      %1465 = vmatpush1.msra.mxu0 %v1454
      %1466 = vmatprep.subr.mxu0 0.0
      %1467 = vmatpush1.msra.mxu0 0.0
      %1468 = vmatprep.subr.mxu0 0.0
      %1469 = vmatpush1.msra.mxu0 0.0
      %1470 = vmatprep.subr.mxu0 0.0
      %1471 = vmatpush1.msra.mxu0 0.0
      %1472 = vmatprep.subr.mxu0 0.0
      %1473 = vmatpush1.msra.mxu0 0.0
      %1474 = vmatprep.subr.mxu0 0.0
      %1475 = vmatpush1.msra.mxu0 0.0
      %1476 = vmatprep.subr.mxu0 0.0
      %1477 = vmatpush1.msra.mxu0 0.0
      %1478 = vmatprep.subr.mxu0 0.0
      %1479 = vmatpush1.msra.mxu0 0.0
      %1480 = vmatprep.subr.mxu0 0.0
      %1481 = vmatpush1.msra.mxu0 0.0
      %1482 = vmatprep.subr.mxu0 0.0
      %1483 = vmatpush1.msra.mxu0 0.0
      %1484 = vmatprep.subr.mxu0 0.0
      %1485 = vmatpush1.msra.mxu0 0.0
      %1486 = vmatprep.subr.mxu0 0.0
      %1487 = vmatpush1.msra.mxu0 0.0
      %1488 = vmatprep.subr.mxu0 0.0
      %1489 = vmatpush1.msra.mxu0 0.0
      %1490 = vmatprep.subr.mxu0 0.0
      %1491 = vmatpush1.msra.mxu0 0.0
      %1492 = vmatprep.subr.mxu0 0.0
      %1493 = vmatpush1.msra.mxu0 0.0
      %1494 = vmatprep.subr.mxu0 0.0
      %1495 = vmatpush1.msra.mxu0 0.0
      %1496 = vmatprep.subr.mxu0 0.0
      %1497 = vmatpush1.msra.mxu0 0.0
      %1498 = vmatprep.subr.mxu0 0.0
      %1499 = vmatpush1.msra.mxu0 0.0
      %1500 = vmatprep.subr.mxu0 0.0
      %1501 = vmatpush1.msra.mxu0 0.0
      %1502 = vmatprep.subr.mxu0 0.0
      %1503 = vmatpush1.msra.mxu0 0.0
      %1504 = vmatprep.subr.mxu0 0.0
      %1505 = vmatpush1.msra.mxu0 0.0
      %1506 = vmatprep.subr.mxu0 0.0
      %1507 = vmatpush1.msra.mxu0 0.0
      %1508 = vmatprep.subr.mxu0 0.0
      %1509 = vmatpush1.msra.mxu0 0.0
      %1510 = vmatprep.subr.mxu0 0.0
      %1511 = vmatpush1.msra.mxu0 0.0
      %1512 = vmatprep.subr.mxu0 0.0
      %1513 = vmatpush1.msra.mxu0 0.0
      %1514 = vmatprep.subr.mxu0 0.0
      %1515 = vmatpush1.msra.mxu0 0.0
      %1516 = vmatprep.subr.mxu0 0.0
      %1517 = vmatpush1.msra.mxu0 0.0
      %1518 = vmatprep.subr.mxu0 0.0
      %1519 = vmatpush1.msra.mxu0 0.0
      %1520 = vmatprep.subr.mxu0 0.0
      %1521 = vmatpush1.msra.mxu0 0.0
      %1522 = vmatprep.mubr.f32.mxu0 0.0
      %1523 = vmatmul.mubr.f32.gmra.mrb[0].mxu0 %v1456
      %v1524 = vpop.f32.mrb[0].mxu0
      %v1525 = vadd.f32 0.0, %v1524
      %v1526 = vpop.f32.mrb[0].mxu0
      %1527 = vdwg.mxu0
      %v1528 = vadd.f32 %v1437, %v1525
      %s1529 = scalar_lea.vmem %s5, 32
      %v1530 = vld [vmem:[%s1529] sm:$0xff]
      %v1531 = vld [vmem:[%s1529 + $0x8] sm:$0xff]
      %v1532 = vld [vmem:[%s1529 + $0x10] sm:$0xff]
      %v1533 = vld [vmem:[%s1529 + $0x18] sm:$0xff]
      %1534 = vrot.lane.b32.xlu0 %v1450, 64
      %v1535 = vpop.permute.xlu0 %1534
      %v1536 = vsel %vm301, %v1535, 0
      %1538 = vmatprep.subr.mxu0 0.0
      %1539 = vmatpush1.msra.mxu0 %v1530
      %1540 = vmatprep.subr.mxu0 0.0
      %1541 = vmatpush1.msra.mxu0 %v1531
      %1542 = vmatprep.subr.mxu0 0.0
      %1543 = vmatpush1.msra.mxu0 %v1532
      %1544 = vmatprep.subr.mxu0 0.0
      %1545 = vmatpush1.msra.mxu0 %v1533
      %1546 = vmatprep.subr.mxu0 0.0
      %1547 = vmatpush1.msra.mxu0 0.0
      %1548 = vmatprep.subr.mxu0 0.0
      %1549 = vmatpush1.msra.mxu0 0.0
      %1550 = vmatprep.subr.mxu0 0.0
      %1551 = vmatpush1.msra.mxu0 0.0
      %1552 = vmatprep.subr.mxu0 0.0
      %1553 = vmatpush1.msra.mxu0 0.0
      %1554 = vmatprep.subr.mxu0 0.0
      %1555 = vmatpush1.msra.mxu0 0.0
      %1556 = vmatprep.subr.mxu0 0.0
      %1557 = vmatpush1.msra.mxu0 0.0
      %1558 = vmatprep.subr.mxu0 0.0
      %1559 = vmatpush1.msra.mxu0 0.0
      %1560 = vmatprep.subr.mxu0 0.0
      %1561 = vmatpush1.msra.mxu0 0.0
      %1562 = vmatprep.subr.mxu0 0.0
      %1563 = vmatpush1.msra.mxu0 0.0
      %1564 = vmatprep.subr.mxu0 0.0
      %1565 = vmatpush1.msra.mxu0 0.0
      %1566 = vmatprep.subr.mxu0 0.0
      %1567 = vmatpush1.msra.mxu0 0.0
      %1568 = vmatprep.subr.mxu0 0.0
      %1569 = vmatpush1.msra.mxu0 0.0
      %1570 = vmatprep.subr.mxu0 0.0
      %1571 = vmatpush1.msra.mxu0 0.0
      %1572 = vmatprep.subr.mxu0 0.0
      %1573 = vmatpush1.msra.mxu0 0.0
      %1574 = vmatprep.subr.mxu0 0.0
      %1575 = vmatpush1.msra.mxu0 0.0
      %1576 = vmatprep.subr.mxu0 0.0
      %1577 = vmatpush1.msra.mxu0 0.0
      %1578 = vmatprep.subr.mxu0 0.0
      %1579 = vmatpush1.msra.mxu0 0.0
      %1580 = vmatprep.subr.mxu0 0.0
      %1581 = vmatpush1.msra.mxu0 0.0
      %1582 = vmatprep.subr.mxu0 0.0
      %1583 = vmatpush1.msra.mxu0 0.0
      %1584 = vmatprep.subr.mxu0 0.0
      %1585 = vmatpush1.msra.mxu0 0.0
      %1586 = vmatprep.subr.mxu0 0.0
      %1587 = vmatpush1.msra.mxu0 0.0
      %1588 = vmatprep.subr.mxu0 0.0
      %1589 = vmatpush1.msra.mxu0 0.0
      %1590 = vmatprep.subr.mxu0 0.0
      %1591 = vmatpush1.msra.mxu0 0.0
      %1592 = vmatprep.subr.mxu0 0.0
      %1593 = vmatpush1.msra.mxu0 0.0
      %1594 = vmatprep.subr.mxu0 0.0
      %1595 = vmatpush1.msra.mxu0 0.0
      %1596 = vmatprep.subr.mxu0 0.0
      %1597 = vmatpush1.msra.mxu0 0.0
      %1598 = vmatprep.subr.mxu0 0.0
      %1599 = vmatpush1.msra.mxu0 0.0
      %1600 = vmatprep.subr.mxu0 0.0
      %1601 = vmatpush1.msra.mxu0 0.0
      %1602 = vmatprep.mubr.f32.mxu0 0.0
      %1603 = vmatmul.mubr.f32.gmra.mrb[0].mxu0 %v1536
      %v1604 = vpop.f32.mrb[0].mxu0
      %v1605 = vadd.f32 0.0, %v1604
      %v1606 = vpop.f32.mrb[0].mxu0
      %1607 = vdwg.mxu0
      %v1608 = vadd.f32 %v1528, %v1605
      %1610 = vrot.lane.b32.xlu0 %v1445, 96
      %v1611 = vpop.permute.xlu0 %1610
      %v1613 = vmax.f32 %v1445, %v1611
      %s1614 = scalar_lea.vmem %s5, 64
      %v1615 = vld [vmem:[%s1614] sm:$0xff]
      %v1616 = vld [vmem:[%s1614 + $0x8] sm:$0xff]
      %v1617 = vld [vmem:[%s1614 + $0x10] sm:$0xff]
      %v1618 = vld [vmem:[%s1614 + $0x18] sm:$0xff]
      %v1620 = vsel %vm301, %v1613, 0
      %1622 = vmatprep.subr.mxu0 0.0
      %1623 = vmatpush1.msra.mxu0 %v1615
      %1624 = vmatprep.subr.mxu0 0.0
      %1625 = vmatpush1.msra.mxu0 %v1616
      %1626 = vmatprep.subr.mxu0 0.0
      %1627 = vmatpush1.msra.mxu0 %v1617
      %1628 = vmatprep.subr.mxu0 0.0
      %1629 = vmatpush1.msra.mxu0 %v1618
      %1630 = vmatprep.subr.mxu0 0.0
      %1631 = vmatpush1.msra.mxu0 0.0
      %1632 = vmatprep.subr.mxu0 0.0
      %1633 = vmatpush1.msra.mxu0 0.0
      %1634 = vmatprep.subr.mxu0 0.0
      %1635 = vmatpush1.msra.mxu0 0.0
      %1636 = vmatprep.subr.mxu0 0.0
      %1637 = vmatpush1.msra.mxu0 0.0
      %1638 = vmatprep.subr.mxu0 0.0
      %1639 = vmatpush1.msra.mxu0 0.0
      %1640 = vmatprep.subr.mxu0 0.0
      %1641 = vmatpush1.msra.mxu0 0.0
      %1642 = vmatprep.subr.mxu0 0.0
      %1643 = vmatpush1.msra.mxu0 0.0
      %1644 = vmatprep.subr.mxu0 0.0
      %1645 = vmatpush1.msra.mxu0 0.0
      %1646 = vmatprep.subr.mxu0 0.0
      %1647 = vmatpush1.msra.mxu0 0.0
      %1648 = vmatprep.subr.mxu0 0.0
      %1649 = vmatpush1.msra.mxu0 0.0
      %1650 = vmatprep.subr.mxu0 0.0
      %1651 = vmatpush1.msra.mxu0 0.0
      %1652 = vmatprep.subr.mxu0 0.0
      %1653 = vmatpush1.msra.mxu0 0.0
      %1654 = vmatprep.subr.mxu0 0.0
      %1655 = vmatpush1.msra.mxu0 0.0
      %1656 = vmatprep.subr.mxu0 0.0
      %1657 = vmatpush1.msra.mxu0 0.0
      %1658 = vmatprep.subr.mxu0 0.0
      %1659 = vmatpush1.msra.mxu0 0.0
      %1660 = vmatprep.subr.mxu0 0.0
      %1661 = vmatpush1.msra.mxu0 0.0
      %1662 = vmatprep.subr.mxu0 0.0
      %1663 = vmatpush1.msra.mxu0 0.0
      %1664 = vmatprep.subr.mxu0 0.0
      %1665 = vmatpush1.msra.mxu0 0.0
      %1666 = vmatprep.subr.mxu0 0.0
      %1667 = vmatpush1.msra.mxu0 0.0
      %1668 = vmatprep.subr.mxu0 0.0
      %1669 = vmatpush1.msra.mxu0 0.0
      %1670 = vmatprep.subr.mxu0 0.0
      %1671 = vmatpush1.msra.mxu0 0.0
      %1672 = vmatprep.subr.mxu0 0.0
      %1673 = vmatpush1.msra.mxu0 0.0
      %1674 = vmatprep.subr.mxu0 0.0
      %1675 = vmatpush1.msra.mxu0 0.0
      %1676 = vmatprep.subr.mxu0 0.0
      %1677 = vmatpush1.msra.mxu0 0.0
      %1678 = vmatprep.subr.mxu0 0.0
      %1679 = vmatpush1.msra.mxu0 0.0
      %1680 = vmatprep.subr.mxu0 0.0
      %1681 = vmatpush1.msra.mxu0 0.0
      %1682 = vmatprep.subr.mxu0 0.0
      %1683 = vmatpush1.msra.mxu0 0.0
      %1684 = vmatprep.subr.mxu0 0.0
      %1685 = vmatpush1.msra.mxu0 0.0
      %1686 = vmatprep.mubr.f32.mxu0 0.0
      %1687 = vmatmul.mubr.f32.gmra.mrb[0].mxu0 %v1620
      %v1688 = vpop.f32.mrb[0].mxu0
      %v1689 = vadd.f32 0.0, %v1688
      %v1690 = vpop.f32.mrb[0].mxu0
      %1691 = vdwg.mxu0
      %v1692 = vadd.f32 %v1608, %v1689
      %s1693 = scalar_lea.vmem %s5, 96
      %v1694 = vld [vmem:[%s1693] sm:$0xff]
      %v1695 = vld [vmem:[%s1693 + $0x8] sm:$0xff]
      %v1696 = vld [vmem:[%s1693 + $0x10] sm:$0xff]
      %v1697 = vld [vmem:[%s1693 + $0x18] sm:$0xff]
      %v1698 = vrot.slane %v1450, 2
      %v1699 = vsel %vm301, %v1698, 0
      %1701 = vmatprep.subr.mxu0 0.0
      %1702 = vmatpush1.msra.mxu0 %v1694
      %1703 = vmatprep.subr.mxu0 0.0
      %1704 = vmatpush1.msra.mxu0 %v1695
      %1705 = vmatprep.subr.mxu0 0.0
      %1706 = vmatpush1.msra.mxu0 %v1696
      %1707 = vmatprep.subr.mxu0 0.0
      %1708 = vmatpush1.msra.mxu0 %v1697
      %1709 = vmatprep.subr.mxu0 0.0
      %1710 = vmatpush1.msra.mxu0 0.0
      %1711 = vmatprep.subr.mxu0 0.0
      %1712 = vmatpush1.msra.mxu0 0.0
      %1713 = vmatprep.subr.mxu0 0.0
      %1714 = vmatpush1.msra.mxu0 0.0
      %1715 = vmatprep.subr.mxu0 0.0
      %1716 = vmatpush1.msra.mxu0 0.0
      %1717 = vmatprep.subr.mxu0 0.0
      %1718 = vmatpush1.msra.mxu0 0.0
      %1719 = vmatprep.subr.mxu0 0.0
      %1720 = vmatpush1.msra.mxu0 0.0
      %1721 = vmatprep.subr.mxu0 0.0
      %1722 = vmatpush1.msra.mxu0 0.0
      %1723 = vmatprep.subr.mxu0 0.0
      %1724 = vmatpush1.msra.mxu0 0.0
      %1725 = vmatprep.subr.mxu0 0.0
      %1726 = vmatpush1.msra.mxu0 0.0
      %1727 = vmatprep.subr.mxu0 0.0
      %1728 = vmatpush1.msra.mxu0 0.0
      %1729 = vmatprep.subr.mxu0 0.0
      %1730 = vmatpush1.msra.mxu0 0.0
      %1731 = vmatprep.subr.mxu0 0.0
      %1732 = vmatpush1.msra.mxu0 0.0
      %1733 = vmatprep.subr.mxu0 0.0
      %1734 = vmatpush1.msra.mxu0 0.0
      %1735 = vmatprep.subr.mxu0 0.0
      %1736 = vmatpush1.msra.mxu0 0.0
      %1737 = vmatprep.subr.mxu0 0.0
      %1738 = vmatpush1.msra.mxu0 0.0
      %1739 = vmatprep.subr.mxu0 0.0
      %1740 = vmatpush1.msra.mxu0 0.0
      %1741 = vmatprep.subr.mxu0 0.0
      %1742 = vmatpush1.msra.mxu0 0.0
      %1743 = vmatprep.subr.mxu0 0.0
      %1744 = vmatpush1.msra.mxu0 0.0
      %1745 = vmatprep.subr.mxu0 0.0
      %1746 = vmatpush1.msra.mxu0 0.0
      %1747 = vmatprep.subr.mxu0 0.0
      %1748 = vmatpush1.msra.mxu0 0.0
      %1749 = vmatprep.subr.mxu0 0.0
      %1750 = vmatpush1.msra.mxu0 0.0
      %1751 = vmatprep.subr.mxu0 0.0
      %1752 = vmatpush1.msra.mxu0 0.0
      %1753 = vmatprep.subr.mxu0 0.0
      %1754 = vmatpush1.msra.mxu0 0.0
      %1755 = vmatprep.subr.mxu0 0.0
      %1756 = vmatpush1.msra.mxu0 0.0
      %1757 = vmatprep.subr.mxu0 0.0
      %1758 = vmatpush1.msra.mxu0 0.0
      %1759 = vmatprep.subr.mxu0 0.0
      %1760 = vmatpush1.msra.mxu0 0.0
      %1761 = vmatprep.subr.mxu0 0.0
      %1762 = vmatpush1.msra.mxu0 0.0
      %1763 = vmatprep.subr.mxu0 0.0
      %1764 = vmatpush1.msra.mxu0 0.0
      %1765 = vmatprep.mubr.f32.mxu0 0.0
      %1766 = vmatmul.mubr.f32.gmra.mrb[0].mxu0 %v1699
      %v1767 = vpop.f32.mrb[0].mxu0
      %v1768 = vadd.f32 0.0, %v1767
      %v1769 = vpop.f32.mrb[0].mxu0
      %1770 = vdwg.mxu0
      %v1771 = vadd.f32 %v1692, %v1768
      %s1772 = scalar_lea.vmem %s5, 128
      %v1773 = vld [vmem:[%s1772] sm:$0xff]
      %v1774 = vld [vmem:[%s1772 + $0x8] sm:$0xff]
      %v1775 = vld [vmem:[%s1772 + $0x10] sm:$0xff]
      %v1776 = vld [vmem:[%s1772 + $0x18] sm:$0xff]
      %1777 = vrot.lane.b32.xlu0 %v1698, 64
      %v1778 = vpop.permute.xlu0 %1777
      %v1779 = vsel %vm301, %v1778, 0
      %1781 = vmatprep.subr.mxu0 0.0
      %1782 = vmatpush1.msra.mxu0 %v1773
      %1783 = vmatprep.subr.mxu0 0.0
      %1784 = vmatpush1.msra.mxu0 %v1774
      %1785 = vmatprep.subr.mxu0 0.0
      %1786 = vmatpush1.msra.mxu0 %v1775
      %1787 = vmatprep.subr.mxu0 0.0
      %1788 = vmatpush1.msra.mxu0 %v1776
      %1789 = vmatprep.subr.mxu0 0.0
      %1790 = vmatpush1.msra.mxu0 0.0
      %1791 = vmatprep.subr.mxu0 0.0
      %1792 = vmatpush1.msra.mxu0 0.0
      %1793 = vmatprep.subr.mxu0 0.0
      %1794 = vmatpush1.msra.mxu0 0.0
      %1795 = vmatprep.subr.mxu0 0.0
      %1796 = vmatpush1.msra.mxu0 0.0
      %1797 = vmatprep.subr.mxu0 0.0
      %1798 = vmatpush1.msra.mxu0 0.0
      %1799 = vmatprep.subr.mxu0 0.0
      %1800 = vmatpush1.msra.mxu0 0.0
      %1801 = vmatprep.subr.mxu0 0.0
      %1802 = vmatpush1.msra.mxu0 0.0
      %1803 = vmatprep.subr.mxu0 0.0
      %1804 = vmatpush1.msra.mxu0 0.0
      %1805 = vmatprep.subr.mxu0 0.0
      %1806 = vmatpush1.msra.mxu0 0.0
      %1807 = vmatprep.subr.mxu0 0.0
      %1808 = vmatpush1.msra.mxu0 0.0
      %1809 = vmatprep.subr.mxu0 0.0
      %1810 = vmatpush1.msra.mxu0 0.0
      %1811 = vmatprep.subr.mxu0 0.0
      %1812 = vmatpush1.msra.mxu0 0.0
      %1813 = vmatprep.subr.mxu0 0.0
      %1814 = vmatpush1.msra.mxu0 0.0
      %1815 = vmatprep.subr.mxu0 0.0
      %1816 = vmatpush1.msra.mxu0 0.0
      %1817 = vmatprep.subr.mxu0 0.0
      %1818 = vmatpush1.msra.mxu0 0.0
      %1819 = vmatprep.subr.mxu0 0.0
      %1820 = vmatpush1.msra.mxu0 0.0
      %1821 = vmatprep.subr.mxu0 0.0
      %1822 = vmatpush1.msra.mxu0 0.0
      %1823 = vmatprep.subr.mxu0 0.0
      %1824 = vmatpush1.msra.mxu0 0.0
      %1825 = vmatprep.subr.mxu0 0.0
      %1826 = vmatpush1.msra.mxu0 0.0
      %1827 = vmatprep.subr.mxu0 0.0
      %1828 = vmatpush1.msra.mxu0 0.0
      %1829 = vmatprep.subr.mxu0 0.0
      %1830 = vmatpush1.msra.mxu0 0.0
      %1831 = vmatprep.subr.mxu0 0.0
      %1832 = vmatpush1.msra.mxu0 0.0
      %1833 = vmatprep.subr.mxu0 0.0
      %1834 = vmatpush1.msra.mxu0 0.0
      %1835 = vmatprep.subr.mxu0 0.0
      %1836 = vmatpush1.msra.mxu0 0.0
      %1837 = vmatprep.subr.mxu0 0.0
      %1838 = vmatpush1.msra.mxu0 0.0
      %1839 = vmatprep.subr.mxu0 0.0
      %1840 = vmatpush1.msra.mxu0 0.0
      %1841 = vmatprep.subr.mxu0 0.0
      %1842 = vmatpush1.msra.mxu0 0.0
      %1843 = vmatprep.subr.mxu0 0.0
      %1844 = vmatpush1.msra.mxu0 0.0
      %1845 = vmatprep.mubr.f32.mxu0 0.0
      %1846 = vmatmul.mubr.f32.gmra.mrb[0].mxu0 %v1779
      %v1847 = vpop.f32.mrb[0].mxu0
      %v1848 = vadd.f32 0.0, %v1847
      %v1849 = vpop.f32.mrb[0].mxu0
      %1850 = vdwg.mxu0
      %v1851 = vadd.f32 %v1771, %v1848
      %s1852 = scalar_lea.vmem %s5, 160
      %v1853 = vld [vmem:[%s1852] sm:$0xff]
      %v1854 = vld [vmem:[%s1852 + $0x8] sm:$0xff]
      %v1855 = vld [vmem:[%s1852 + $0x10] sm:$0xff]
      %v1856 = vld [vmem:[%s1852 + $0x18] sm:$0xff]
      %v1857 = vrot.slane %v1613, 2
      %v1858 = vsel %vm301, %v1857, 0
      %1860 = vmatprep.subr.mxu0 0.0
      %1861 = vmatpush1.msra.mxu0 %v1853
      %1862 = vmatprep.subr.mxu0 0.0
      %1863 = vmatpush1.msra.mxu0 %v1854
      %1864 = vmatprep.subr.mxu0 0.0
      %1865 = vmatpush1.msra.mxu0 %v1855
      %1866 = vmatprep.subr.mxu0 0.0
      %1867 = vmatpush1.msra.mxu0 %v1856
      %1868 = vmatprep.subr.mxu0 0.0
      %1869 = vmatpush1.msra.mxu0 0.0
      %1870 = vmatprep.subr.mxu0 0.0
      %1871 = vmatpush1.msra.mxu0 0.0
      %1872 = vmatprep.subr.mxu0 0.0
      %1873 = vmatpush1.msra.mxu0 0.0
      %1874 = vmatprep.subr.mxu0 0.0
      %1875 = vmatpush1.msra.mxu0 0.0
      %1876 = vmatprep.subr.mxu0 0.0
      %1877 = vmatpush1.msra.mxu0 0.0
      %1878 = vmatprep.subr.mxu0 0.0
      %1879 = vmatpush1.msra.mxu0 0.0
      %1880 = vmatprep.subr.mxu0 0.0
      %1881 = vmatpush1.msra.mxu0 0.0
      %1882 = vmatprep.subr.mxu0 0.0
      %1883 = vmatpush1.msra.mxu0 0.0
      %1884 = vmatprep.subr.mxu0 0.0
      %1885 = vmatpush1.msra.mxu0 0.0
      %1886 = vmatprep.subr.mxu0 0.0
      %1887 = vmatpush1.msra.mxu0 0.0
      %1888 = vmatprep.subr.mxu0 0.0
      %1889 = vmatpush1.msra.mxu0 0.0
      %1890 = vmatprep.subr.mxu0 0.0
      %1891 = vmatpush1.msra.mxu0 0.0
      %1892 = vmatprep.subr.mxu0 0.0
      %1893 = vmatpush1.msra.mxu0 0.0
      %1894 = vmatprep.subr.mxu0 0.0
      %1895 = vmatpush1.msra.mxu0 0.0
      %1896 = vmatprep.subr.mxu0 0.0
      %1897 = vmatpush1.msra.mxu0 0.0
      %1898 = vmatprep.subr.mxu0 0.0
      %1899 = vmatpush1.msra.mxu0 0.0
      %1900 = vmatprep.subr.mxu0 0.0
      %1901 = vmatpush1.msra.mxu0 0.0
      %1902 = vmatprep.subr.mxu0 0.0
      %1903 = vmatpush1.msra.mxu0 0.0
      %1904 = vmatprep.subr.mxu0 0.0
      %1905 = vmatpush1.msra.mxu0 0.0
      %1906 = vmatprep.subr.mxu0 0.0
      %1907 = vmatpush1.msra.mxu0 0.0
      %1908 = vmatprep.subr.mxu0 0.0
      %1909 = vmatpush1.msra.mxu0 0.0
      %1910 = vmatprep.subr.mxu0 0.0
      %1911 = vmatpush1.msra.mxu0 0.0
      %1912 = vmatprep.subr.mxu0 0.0
      %1913 = vmatpush1.msra.mxu0 0.0
      %1914 = vmatprep.subr.mxu0 0.0
      %1915 = vmatpush1.msra.mxu0 0.0
      %1916 = vmatprep.subr.mxu0 0.0
      %1917 = vmatpush1.msra.mxu0 0.0
      %1918 = vmatprep.subr.mxu0 0.0
      %1919 = vmatpush1.msra.mxu0 0.0
      %1920 = vmatprep.subr.mxu0 0.0
      %1921 = vmatpush1.msra.mxu0 0.0
      %1922 = vmatprep.subr.mxu0 0.0
      %1923 = vmatpush1.msra.mxu0 0.0
      %1924 = vmatprep.mubr.f32.mxu0 0.0
      %1925 = vmatmul.mubr.f32.gmra.mrb[0].mxu0 %v1858
      %v1926 = vpop.f32.mrb[0].mxu0
      %v1927 = vadd.f32 0.0, %v1926
      %v1928 = vpop.f32.mrb[0].mxu0
      %1929 = vdwg.mxu0
      %v1930 = vadd.f32 %v1851, %v1927
      %s1931 = scalar_lea.vmem %s5, 192
      %v1932 = vld [vmem:[%s1931] sm:$0xff]
      %v1933 = vld [vmem:[%s1931 + $0x8] sm:$0xff]
      %v1934 = vld [vmem:[%s1931 + $0x10] sm:$0xff]
      %v1935 = vld [vmem:[%s1931 + $0x18] sm:$0xff]
      %v1936 = vrot.slane %v1450, 4
      %v1937 = vsel %vm301, %v1936, 0
      %1939 = vmatprep.subr.mxu0 0.0
      %1940 = vmatpush1.msra.mxu0 %v1932
      %1941 = vmatprep.subr.mxu0 0.0
      %1942 = vmatpush1.msra.mxu0 %v1933
      %1943 = vmatprep.subr.mxu0 0.0
      %1944 = vmatpush1.msra.mxu0 %v1934
      %1945 = vmatprep.subr.mxu0 0.0
      %1946 = vmatpush1.msra.mxu0 %v1935
      %1947 = vmatprep.subr.mxu0 0.0
      %1948 = vmatpush1.msra.mxu0 0.0
      %1949 = vmatprep.subr.mxu0 0.0
      %1950 = vmatpush1.msra.mxu0 0.0
      %1951 = vmatprep.subr.mxu0 0.0
      %1952 = vmatpush1.msra.mxu0 0.0
      %1953 = vmatprep.subr.mxu0 0.0
      %1954 = vmatpush1.msra.mxu0 0.0
      %1955 = vmatprep.subr.mxu0 0.0
      %1956 = vmatpush1.msra.mxu0 0.0
      %1957 = vmatprep.subr.mxu0 0.0
      %1958 = vmatpush1.msra.mxu0 0.0
      %1959 = vmatprep.subr.mxu0 0.0
      %1960 = vmatpush1.msra.mxu0 0.0
      %1961 = vmatprep.subr.mxu0 0.0
      %1962 = vmatpush1.msra.mxu0 0.0
      %1963 = vmatprep.subr.mxu0 0.0
      %1964 = vmatpush1.msra.mxu0 0.0
      %1965 = vmatprep.subr.mxu0 0.0
      %1966 = vmatpush1.msra.mxu0 0.0
      %1967 = vmatprep.subr.mxu0 0.0
      %1968 = vmatpush1.msra.mxu0 0.0
      %1969 = vmatprep.subr.mxu0 0.0
      %1970 = vmatpush1.msra.mxu0 0.0
      %1971 = vmatprep.subr.mxu0 0.0
      %1972 = vmatpush1.msra.mxu0 0.0
      %1973 = vmatprep.subr.mxu0 0.0
      %1974 = vmatpush1.msra.mxu0 0.0
      %1975 = vmatprep.subr.mxu0 0.0
      %1976 = vmatpush1.msra.mxu0 0.0
      %1977 = vmatprep.subr.mxu0 0.0
      %1978 = vmatpush1.msra.mxu0 0.0
      %1979 = vmatprep.subr.mxu0 0.0
      %1980 = vmatpush1.msra.mxu0 0.0
      %1981 = vmatprep.subr.mxu0 0.0
      %1982 = vmatpush1.msra.mxu0 0.0
      %1983 = vmatprep.subr.mxu0 0.0
      %1984 = vmatpush1.msra.mxu0 0.0
      %1985 = vmatprep.subr.mxu0 0.0
      %1986 = vmatpush1.msra.mxu0 0.0
      %1987 = vmatprep.subr.mxu0 0.0
      %1988 = vmatpush1.msra.mxu0 0.0
      %1989 = vmatprep.subr.mxu0 0.0
      %1990 = vmatpush1.msra.mxu0 0.0
      %1991 = vmatprep.subr.mxu0 0.0
      %1992 = vmatpush1.msra.mxu0 0.0
      %1993 = vmatprep.subr.mxu0 0.0
      %1994 = vmatpush1.msra.mxu0 0.0
      %1995 = vmatprep.subr.mxu0 0.0
      %1996 = vmatpush1.msra.mxu0 0.0
      %1997 = vmatprep.subr.mxu0 0.0
      %1998 = vmatpush1.msra.mxu0 0.0
      %1999 = vmatprep.subr.mxu0 0.0
      %2000 = vmatpush1.msra.mxu0 0.0
      %2001 = vmatprep.subr.mxu0 0.0
      %2002 = vmatpush1.msra.mxu0 0.0
      %2003 = vmatprep.mubr.f32.mxu0 0.0
      %2004 = vmatmul.mubr.f32.gmra.mrb[0].mxu0 %v1937
      %v2005 = vpop.f32.mrb[0].mxu0
      %v2006 = vadd.f32 0.0, %v2005
      %v2007 = vpop.f32.mrb[0].mxu0
      %2008 = vdwg.mxu0
      %v2009 = vadd.f32 %v1930, %v2006
      %s2010 = scalar_lea.vmem %s5, 224
      %v2011 = vld [vmem:[%s2010] sm:$0xff]
      %v2012 = vld [vmem:[%s2010 + $0x8] sm:$0xff]
      %v2013 = vld [vmem:[%s2010 + $0x10] sm:$0xff]
      %v2014 = vld [vmem:[%s2010 + $0x18] sm:$0xff]
      %2015 = vrot.lane.b32.xlu0 %v1936, 64
      %v2016 = vpop.permute.xlu0 %2015
      %v2017 = vsel %vm301, %v2016, 0
      %2019 = vmatprep.subr.mxu0 0.0
      %2020 = vmatpush1.msra.mxu0 %v2011
      %2021 = vmatprep.subr.mxu0 0.0
      %2022 = vmatpush1.msra.mxu0 %v2012
      %2023 = vmatprep.subr.mxu0 0.0
      %2024 = vmatpush1.msra.mxu0 %v2013
      %2025 = vmatprep.subr.mxu0 0.0
      %2026 = vmatpush1.msra.mxu0 %v2014
      %2027 = vmatprep.subr.mxu0 0.0
      %2028 = vmatpush1.msra.mxu0 0.0
      %2029 = vmatprep.subr.mxu0 0.0
      %2030 = vmatpush1.msra.mxu0 0.0
      %2031 = vmatprep.subr.mxu0 0.0
      %2032 = vmatpush1.msra.mxu0 0.0
      %2033 = vmatprep.subr.mxu0 0.0
      %2034 = vmatpush1.msra.mxu0 0.0
      %2035 = vmatprep.subr.mxu0 0.0
      %2036 = vmatpush1.msra.mxu0 0.0
      %2037 = vmatprep.subr.mxu0 0.0
      %2038 = vmatpush1.msra.mxu0 0.0
      %2039 = vmatprep.subr.mxu0 0.0
      %2040 = vmatpush1.msra.mxu0 0.0
      %2041 = vmatprep.subr.mxu0 0.0
      %2042 = vmatpush1.msra.mxu0 0.0
      %2043 = vmatprep.subr.mxu0 0.0
      %2044 = vmatpush1.msra.mxu0 0.0
      %2045 = vmatprep.subr.mxu0 0.0
      %2046 = vmatpush1.msra.mxu0 0.0
      %2047 = vmatprep.subr.mxu0 0.0
      %2048 = vmatpush1.msra.mxu0 0.0
      %2049 = vmatprep.subr.mxu0 0.0
      %2050 = vmatpush1.msra.mxu0 0.0
      %2051 = vmatprep.subr.mxu0 0.0
      %2052 = vmatpush1.msra.mxu0 0.0
      %2053 = vmatprep.subr.mxu0 0.0
      %2054 = vmatpush1.msra.mxu0 0.0
      %2055 = vmatprep.subr.mxu0 0.0
      %2056 = vmatpush1.msra.mxu0 0.0
      %2057 = vmatprep.subr.mxu0 0.0
      %2058 = vmatpush1.msra.mxu0 0.0
      %2059 = vmatprep.subr.mxu0 0.0
      %2060 = vmatpush1.msra.mxu0 0.0
      %2061 = vmatprep.subr.mxu0 0.0
      %2062 = vmatpush1.msra.mxu0 0.0
      %2063 = vmatprep.subr.mxu0 0.0
      %2064 = vmatpush1.msra.mxu0 0.0
      %2065 = vmatprep.subr.mxu0 0.0
      %2066 = vmatpush1.msra.mxu0 0.0
      %2067 = vmatprep.subr.mxu0 0.0
      %2068 = vmatpush1.msra.mxu0 0.0
      %2069 = vmatprep.subr.mxu0 0.0
      %2070 = vmatpush1.msra.mxu0 0.0
      %2071 = vmatprep.subr.mxu0 0.0
      %2072 = vmatpush1.msra.mxu0 0.0
      %2073 = vmatprep.subr.mxu0 0.0
      %2074 = vmatpush1.msra.mxu0 0.0
      %2075 = vmatprep.subr.mxu0 0.0
      %2076 = vmatpush1.msra.mxu0 0.0
      %2077 = vmatprep.subr.mxu0 0.0
      %2078 = vmatpush1.msra.mxu0 0.0
      %2079 = vmatprep.subr.mxu0 0.0
      %2080 = vmatpush1.msra.mxu0 0.0
      %2081 = vmatprep.subr.mxu0 0.0
      %2082 = vmatpush1.msra.mxu0 0.0
      %2083 = vmatprep.mubr.f32.mxu0 0.0
      %2084 = vmatmul.mubr.f32.gmra.mrb[0].mxu0 %v2017
      %v2085 = vpop.f32.mrb[0].mxu0
      %v2086 = vadd.f32 0.0, %v2085
      %v2087 = vpop.f32.mrb[0].mxu0
      %2088 = vdwg.mxu0
      %v2089 = vadd.f32 %v2009, %v2086
      %s2090 = scalar_lea.vmem %s5, 256
      %v2091 = vld [vmem:[%s2090] sm:$0xff]
      %v2092 = vld [vmem:[%s2090 + $0x8] sm:$0xff]
      %v2093 = vld [vmem:[%s2090 + $0x10] sm:$0xff]
      %v2094 = vld [vmem:[%s2090 + $0x18] sm:$0xff]
      %v2095 = vrot.slane %v1613, 4
      %v2096 = vsel %vm301, %v2095, 0
      %2098 = vmatprep.subr.mxu0 0.0
      %2099 = vmatpush1.msra.mxu0 %v2091
      %2100 = vmatprep.subr.mxu0 0.0
      %2101 = vmatpush1.msra.mxu0 %v2092
      %2102 = vmatprep.subr.mxu0 0.0
      %2103 = vmatpush1.msra.mxu0 %v2093
      %2104 = vmatprep.subr.mxu0 0.0
      %2105 = vmatpush1.msra.mxu0 %v2094
      %2106 = vmatprep.subr.mxu0 0.0
      %2107 = vmatpush1.msra.mxu0 0.0
      %2108 = vmatprep.subr.mxu0 0.0
      %2109 = vmatpush1.msra.mxu0 0.0
      %2110 = vmatprep.subr.mxu0 0.0
      %2111 = vmatpush1.msra.mxu0 0.0
      %2112 = vmatprep.subr.mxu0 0.0
      %2113 = vmatpush1.msra.mxu0 0.0
      %2114 = vmatprep.subr.mxu0 0.0
      %2115 = vmatpush1.msra.mxu0 0.0
      %2116 = vmatprep.subr.mxu0 0.0
      %2117 = vmatpush1.msra.mxu0 0.0
      %2118 = vmatprep.subr.mxu0 0.0
      %2119 = vmatpush1.msra.mxu0 0.0
      %2120 = vmatprep.subr.mxu0 0.0
      %2121 = vmatpush1.msra.mxu0 0.0
      %2122 = vmatprep.subr.mxu0 0.0
      %2123 = vmatpush1.msra.mxu0 0.0
      %2124 = vmatprep.subr.mxu0 0.0
      %2125 = vmatpush1.msra.mxu0 0.0
      %2126 = vmatprep.subr.mxu0 0.0
      %2127 = vmatpush1.msra.mxu0 0.0
      %2128 = vmatprep.subr.mxu0 0.0
      %2129 = vmatpush1.msra.mxu0 0.0
      %2130 = vmatprep.subr.mxu0 0.0
      %2131 = vmatpush1.msra.mxu0 0.0
      %2132 = vmatprep.subr.mxu0 0.0
      %2133 = vmatpush1.msra.mxu0 0.0
      %2134 = vmatprep.subr.mxu0 0.0
      %2135 = vmatpush1.msra.mxu0 0.0
      %2136 = vmatprep.subr.mxu0 0.0
      %2137 = vmatpush1.msra.mxu0 0.0
      %2138 = vmatprep.subr.mxu0 0.0
      %2139 = vmatpush1.msra.mxu0 0.0
      %2140 = vmatprep.subr.mxu0 0.0
      %2141 = vmatpush1.msra.mxu0 0.0
      %2142 = vmatprep.subr.mxu0 0.0
      %2143 = vmatpush1.msra.mxu0 0.0
      %2144 = vmatprep.subr.mxu0 0.0
      %2145 = vmatpush1.msra.mxu0 0.0
      %2146 = vmatprep.subr.mxu0 0.0
      %2147 = vmatpush1.msra.mxu0 0.0
      %2148 = vmatprep.subr.mxu0 0.0
      %2149 = vmatpush1.msra.mxu0 0.0
      %2150 = vmatprep.subr.mxu0 0.0
      %2151 = vmatpush1.msra.mxu0 0.0
      %2152 = vmatprep.subr.mxu0 0.0
      %2153 = vmatpush1.msra.mxu0 0.0
      %2154 = vmatprep.subr.mxu0 0.0
      %2155 = vmatpush1.msra.mxu0 0.0
      %2156 = vmatprep.subr.mxu0 0.0
      %2157 = vmatpush1.msra.mxu0 0.0
      %2158 = vmatprep.subr.mxu0 0.0
      %2159 = vmatpush1.msra.mxu0 0.0
      %2160 = vmatprep.subr.mxu0 0.0
      %2161 = vmatpush1.msra.mxu0 0.0
      %2162 = vmatprep.mubr.f32.mxu0 0.0
      %2163 = vmatmul.mubr.f32.gmra.mrb[0].mxu0 %v2096
      %v2164 = vpop.f32.mrb[0].mxu0
      %v2165 = vadd.f32 0.0, %v2164
      %v2166 = vpop.f32.mrb[0].mxu0
      %2167 = vdwg.mxu0
      %v2168 = vadd.f32 %v2089, %v2165
      %vm2169 = vcmask 8192
      %2170 = vst.msk [vmem:[%s274] sm:$0x1] %vm2169, %v2168
      %p2171 = scmp.lt.s32.totalorder %s18, 1
      %s2172 = scalar_select %p2171, %s18, 1
      %s2173 = scalar_lea.vmem %s7, %s2172
      // Predicated region
      $region49: #{convtransposenet_forward.1} parent=47 // pred_check
        %p2174 = pneg %p188
      $region50: #{convtransposenet_forward.1} parent=47 // pred_check_branch
        %2176 = sbr.rel (%p2174) target = $region52
      $region51: #{convtransposenet_forward.1} parent=47 // pred_region
        _
      $region52: #{convtransposenet_forward.1} parent=47 // pred_fallthru
        _
    $region48: #{convtransposenet_forward.1} parent=5 // pred_fallthru
      _
    %p2177 = scmp.le.s32.totalorder 2, %s13
    // Predicated region
    $region53: #{convtransposenet_forward.1} parent=5 // pred_check
      %p2178 = pneg %p2177
    $region54: #{convtransposenet_forward.1} parent=5 // pred_check_branch
      %2180 = sbr.rel (%p2178) target = $region56
    $region55: #{convtransposenet_forward.1} parent=5 // pred_region
      %s2181 = ssub.s32 %s13, 2
      // Predicated region
      $region57: #{convtransposenet_forward.1} parent=55 // pred_check
        %p2182 = pneg %p194
      $region58: #{convtransposenet_forward.1} parent=55 // pred_check_branch
        %2184 = sbr.rel (%p2182) target = $region60
      $region59: #{convtransposenet_forward.1} parent=55 // pred_region
        %p2185 = scmp.lt.s32.totalorder %s19, 1
        %s2186 = scalar_select %p2185, %s19, 1
        %s2187 = scalar_lea.vmem %s7, %s2186
      $region60: #{convtransposenet_forward.1} parent=55 // pred_fallthru
        _
    $region56: #{convtransposenet_forward.1} parent=5 // pred_fallthru
      _
  $region6: #{convtransposenet_forward.1} parent=0 // loop_footer
    %s17 = sadd.s32 1, %s13
  $region7: #{convtransposenet_forward.1} parent=0 // loop_footer_branch
    %12 = sbr.rel target = $region3
  $region8: #{convtransposenet_forward.1} parent=0 // loop_exit
    _

</llo_original>
